<compile_context>
chip_gen: v6e
topology: v6e:2x2x1
jax: 0.10.0
libtpu: 0.0.40
codegen_flags: <defaults>
</compile_context>

<pallas_src>
import math
import functools

import jax
import jax.numpy as jnp
from jax.experimental import pallas as pl
from jax.experimental.pallas import tpu as pltpu


def _round_up(x, m):
    return ((x + m - 1) // m) * m


# ----------------------------------------------------------------------------- #
# Pallas kernel: embedding -> 1-layer transformer -> vocab head -> masked CE loss
# ----------------------------------------------------------------------------- #
def _maskgit_kernel(meta_ref, krow_ref, wbig_ref, emb_ref, w2_ref, pvec_ref,
                    loss_ref, *, vocab_size, d_model, d_ff, vocab_pad):
    f32 = jnp.float32
    bf16 = jnp.bfloat16
    BL = meta_ref.shape[0]
    D, DF, VP = d_model, d_ff, vocab_pad
    V1P = emb_ref.shape[0]

    def layernorm(x, g, b):          # f32 elementwise (VPU/EUP), v5e-safe
        mu = jnp.mean(x, axis=-1, keepdims=True)
        var = jnp.mean(jnp.square(x - mu), axis=-1, keepdims=True)
        return (x - mu) * jax.lax.rsqrt(var + 1e-5) * g + b

    def mm(a, wt):                   # bf16 MXU matmul, f32 accumulation
        return jnp.dot(a.astype(bf16), wt, preferred_element_type=f32)

    # ---- unpack the packed per-row / per-key / parameter slabs ----
    meta = meta_ref[...]                          # (BL, 8) int32
    ids = meta[:, 0:1]                            # token ids
    tgt = meta[:, 1:2]                            # CE target ids
    w = meta[:, 2:3].astype(f32)                  # CE row weights (0/1)
    q_batch = meta[:, 3:4].astype(f32)            # per-query batch id

    krow = krow_ref[...]                          # (2, BL) f32
    k_bias = krow[0:1, :]                         # -1e9 at padded keys else 0
    k_batch = krow[1:2, :]                        # per-key batch id

    pv = pvec_ref[...]                            # (8, 256) f32 packed vectors
    ln1g, ln1b = pv[0:1, 0:D], pv[0:1, D:2 * D]
    ln2g, ln2b = pv[1:2, 0:D], pv[1:2, D:2 * D]
    lnfg, lnfb = pv[2:3, 0:D], pv[2:3, D:2 * D]
    b1 = pv[3:4, 0:DF]
    b2 = pv[4:5, 0:D]
    bout = pv[4:5, D:D + VP]

    # ---- token embedding: 2-D one-hot (bf16) @ embedding table (bf16) ----
    emb_iota = jax.lax.broadcasted_iota(jnp.int32, (BL, V1P), 1)
    onehot = (emb_iota == ids).astype(bf16)                          # (BL, V1P)
    x = jnp.dot(onehot, emb_ref[...], preferred_element_type=f32)    # (BL, D) f32

    # ---- additive attention bias built in-kernel (no (BL,BL) HBM traffic) ----
    # block-diagonal batch mask + key-padding mask.  Every query row has at least one
    # same-batch unpadded key (target rows are never padded), so softmax is well-defined.
    bias = jnp.where(q_batch == k_batch, 0.0, -1e9) + k_bias         # (BL, BL) f32

    # ---- pre-LN single-head self-attention, flat (BL, BL) scores ----
    # 1/sqrt(D) scale is pre-folded into the Q columns of wqkv.
    h = layernorm(x, ln1g, ln1b)
    qkv = mm(h, wbig_ref[:, 0:3 * D])                                # (BL, 3D) f32
    q = qkv[:, :D]
    k = qkv[:, D:2 * D]
    v = qkv[:, 2 * D:3 * D]
    scores = jnp.einsum('qd,kd->qk', q.astype(bf16), k.astype(bf16),
                        preferred_element_type=f32) + bias           # (BL, BL)
    mx = jnp.max(scores, axis=-1, keepdims=True)
    ex = jnp.exp(scores - mx)
    attn = ex * pl.reciprocal(jnp.sum(ex, axis=-1, keepdims=True), approx=True)
    o = mm(attn, v.astype(bf16))                                     # (BL, D) f32
    x = x + mm(o, wbig_ref[:, 3 * D:4 * D])

    # ---- feed-forward (tanh-approx GELU, f32 elementwise) ----
    h2 = layernorm(x, ln2g, ln2b)
    f = mm(h2, wbig_ref[:, 4 * D:4 * D + DF]) + b1
    f = 0.5 * f * (1.0 + jnp.tanh(0.7978845608028654 * (f + 0.044715 * f * f * f)))
    x = x + mm(f, w2_ref[...]) + b2

    # ---- vocab head on the flat slab ----
    hf = layernorm(x, lnfg, lnfb)
    logits = mm(hf, wbig_ref[:, 4 * D + DF:4 * D + DF + VP]) + bout  # (BL, VP) f32

    # ---- masked cross-entropy on the lane-dense 2-D slab ----
    col = jax.lax.broadcasted_iota(jnp.int32, (BL, VP), 1)
    lg = jnp.where(col < vocab_size, logits, -1e9)   # exclude padded vocab columns
    lmax = jnp.max(lg, axis=-1, keepdims=True)
    lse = jnp.log(jnp.sum(jnp.exp(lg - lmax), axis=-1, keepdims=True)) + lmax
    tgt_logit = jnp.sum(jnp.where(col == tgt, lg, 0.0),
                        axis=-1, keepdims=True)                      # (BL, 1)
    ce = lse - tgt_logit                                             # (BL, 1)
    # denominator >= 1 by construction (on-device empty-mask guard); clamp for safety
    loss_ref[0, 0] = jnp.sum(ce * w) / jnp.maximum(jnp.sum(w), 1.0)


def maskgit_pallas_call(meta, krow, params, *, vocab_size):
    """Single-program pallas_call; every operand fits in VMEM at these sizes, so all
    inputs are whole-array VMEM blocks and the scalar loss is an SMEM output."""
    wbig, emb, w2, pvec = params
    BL = meta.shape[0]
    D = emb.shape[1]
    DF = w2.shape[0]
    V1P = emb.shape[0]
    VP = wbig.shape[1] - 4 * D - DF

    kernel = functools.partial(_maskgit_kernel, vocab_size=vocab_size,
                               d_model=D, d_ff=DF, vocab_pad=VP)

    inputs = (meta, krow, wbig, emb, w2, pvec)
    flops = 2 * BL * (V1P * D + D * 3 * D + 2 * BL * D + D * D + 2 * D * DF + D * VP)
    transcendentals = BL * (BL + DF + VP)
    bytes_accessed = sum(int(a.size) * a.dtype.itemsize for a in inputs) + 4

    vmem = pltpu.MemorySpace.VMEM
    return pl.pallas_call(
        kernel,
        out_shape=jax.ShapeDtypeStruct((1, 1), jnp.float32),
        in_specs=[pl.BlockSpec(memory_space=vmem) for _ in inputs],
        out_specs=pl.BlockSpec(memory_space=pltpu.MemorySpace.SMEM),
        cost_estimate=pl.CostEstimate(flops=flops,
                                      transcendentals=transcendentals,
                                      bytes_accessed=bytes_accessed),
    )(*inputs)


# ----------------------------------------------------------------------------- #
# Parameters (deterministic, synthetic): packed bf16 weight slab + packed f32 vectors
# ----------------------------------------------------------------------------- #
def init_params(key, vocab_size, mask_token_id, d_model, d_ff):
    v1 = max(vocab_size, mask_token_id + 1)      # embedding rows incl. mask token
    v1p = _round_up(v1, 128)
    vp = _round_up(vocab_size, 128)
    ks = jax.random.split(key, 6)
    s = 0.02
    f32, bf16 = jnp.float32, jnp.bfloat16

    emb = jnp.zeros((v1p, d_model), f32).at[:v1].set(
        s * jax.random.normal(ks[0], (v1, d_model), f32)).astype(bf16)

    wqkv = s * jax.random.normal(ks[1], (d_model, 3 * d_model), f32)
    # fold the 1/sqrt(D) attention scale into the Q columns (saves a (BL,BL) multiply)
    wqkv = wqkv.at[:, :d_model].mul(1.0 / math.sqrt(d_model))
    wo = s * jax.random.normal(ks[2], (d_model, d_model), f32)
    w1 = s * jax.random.normal(ks[3], (d_model, d_ff), f32)
    wout = jnp.zeros((d_model, vp), f32).at[:, :vocab_size].set(
        s * jax.random.normal(ks[5], (d_model, vocab_size), f32))
    # packed lane-dense weight slab: [wqkv | wo | w1 | wout]  -> (D, 4D + DF + VP)
    wbig = jnp.concatenate([wqkv, wo, w1, wout], axis=1).astype(bf16)

    w2 = (s * jax.random.normal(ks[4], (d_ff, d_model), f32)).astype(bf16)

    # packed small-vector slab (f32):
    #   row 0: ln1 gamma | ln1 beta
    #   row 1: ln2 gamma | ln2 beta
    #   row 2: lnf gamma | lnf beta
    #   row 3: b1 (d_ff)
    #   row 4: b2 (d_model) | bout (vp)
    pw = max(2 * d_model, d_ff, d_model + vp)
    pvec = jnp.zeros((8, pw), f32)
    pvec = pvec.at[0, :d_model].set(1.0)
    pvec = pvec.at[1, :d_model].set(1.0)
    pvec = pvec.at[2, :d_model].set(1.0)
    return (wbig, emb, w2, pvec)


# ----------------------------------------------------------------------------- #
# MaskGit.forward (fully jitted glue; hot path in the Pallas kernel)
# ----------------------------------------------------------------------------- #
@functools.partial(jax.jit, static_argnames=("vocab_size", "mask_token_id", "noise_prob"))
def maskgit_forward(params, input_indices, input_mask, target_indices, key,
                    *, vocab_size, mask_token_id, noise_prob):
    B, Lt = target_indices.shape
    Lin = input_indices.shape[1]
    L = Lt + Lin
    BL = B * L
    k_ratio, k_mask, k_col, k_noise, k_rand = jax.random.split(key, 5)

    # random.random() -> on-device uniform (no host sync)
    mask_ratio = jax.random.uniform(k_ratio, ())
    # _create_random_mask, with the "all-masked" fallback kept on-device
    target_mask = jax.random.uniform(k_mask, (B, Lt)) < mask_ratio
    all_masked = jnp.all(target_mask)
    col = jax.random.randint(k_col, (), 0, Lt)
    clear_col = (jnp.arange(Lt)[None, :] == col) & all_masked
    target_mask = target_mask & ~clear_col

    # padding mask: True = padded key position (target positions never padded)
    padding_mask = ~jnp.concatenate(
        [jnp.ones_like(target_indices), input_mask], axis=1).astype(bool)

    # _add_noise_random_replace, then replace non-kept positions with the mask token
    noise_mask = jax.random.uniform(k_noise, (B, Lt)) < noise_prob
    random_tokens = jax.random.randint(k_rand, (B, Lt), 0, vocab_size)
    noisy = jnp.where(noise_mask, random_tokens, target_indices)
    masked_indices = jnp.where(target_mask, noisy, mask_token_id)

    full_ids = jnp.concatenate([masked_indices, input_indices], axis=1).astype(jnp.int32)

    # flat CE targets / weights: loss only on the first Lt positions where ~target_mask
    tgt_full = jnp.concatenate(
        [target_indices.astype(jnp.int32), jnp.zeros((B, Lin), jnp.int32)], axis=1)
    w_full = jnp.concatenate(
        [(~target_mask).astype(jnp.int32), jnp.zeros((B, Lin), jnp.int32)], axis=1)
    batch_ids = jnp.repeat(jnp.arange(B, dtype=jnp.int32), L)

    # packed per-row slab: [token id | target id | loss weight | batch id | 0...]
    meta = jnp.stack([full_ids.reshape(BL), tgt_full.reshape(BL),
                      w_full.reshape(BL), batch_ids], axis=1)
    meta = jnp.pad(meta, ((0, 0), (0, 4)))                    # (BL, 8) int32

    # packed per-key slab: row 0 = additive key-padding bias, row 1 = key batch id
    key_bias = jnp.where(padding_mask.reshape(BL), -1e9, 0.0).astype(jnp.float32)
    krow = jnp.stack([key_bias, batch_ids.astype(jnp.float32)], axis=0)   # (2, BL)

    loss = maskgit_pallas_call(meta, krow, params, vocab_size=vocab_size)
    return loss[0, 0]


if __name__ == "__main__":
    # small shapes consistent with the module's (B, L) token interface
    B, L_TGT, L_IN = 2, 8, 8
    VOCAB = 32
    MASK_TOKEN_ID = VOCAB               # mask token lives one past the vocab
    D_MODEL, D_FF = 128, 256            # lane-dense synthetic transformer sizes
    NOISE_PROB = 0.15

    root = jax.random.PRNGKey(0)
    k_param, k_in, k_tgt, k_fwd = jax.random.split(root, 4)

    params = init_params(k_param, VOCAB, MASK_TOKEN_ID, D_MODEL, D_FF)

    input_indices = jax.random.randint(k_in, (B, L_IN), 0, VOCAB, dtype=jnp.int32)
    target_indices = jax.random.randint(k_tgt, (B, L_TGT), 0, VOCAB, dtype=jnp.int32)
    # input_mask: 1 = valid token, 0 = padding (last two positions of sample 1 padded)
    input_mask = jnp.ones((B, L_IN), jnp.int32).at[1, -2:].set(0)

    loss = maskgit_forward(params, input_indices, input_mask, target_indices, k_fwd,
                           vocab_size=VOCAB, mask_token_id=MASK_TOKEN_ID,
                           noise_prob=NOISE_PROB)
    loss = jax.block_until_ready(loss)
    assert jnp.isfinite(loss), f"non-finite loss: {loss}"
    print("KERNEL_OK")
</pallas_src>

<mosaic_0001>
module attributes {stable_mosaic.version = 11 : i64} {
  func.func @_maskgit_kernel(%arg0: memref<32x8xi32, #tpu.memory_space<vmem>>, %arg1: memref<2x32xf32, #tpu.memory_space<vmem>>, %arg2: memref<128x896xbf16, #tpu.memory_space<vmem>>, %arg3: memref<128x128xbf16, #tpu.memory_space<vmem>>, %arg4: memref<256x128xbf16, #tpu.memory_space<vmem>>, %arg5: memref<8x256xf32, #tpu.memory_space<vmem>>, %arg6: memref<1x1xf32, #tpu.memory_space<smem>>) attributes {dimension_semantics = [], scalar_prefetch = 0 : i64, scratch_operands = 0 : i64, tpu.core_type = #tpu.core_type<tc>} {
    %c0 = arith.constant 0 : index
    %c0_0 = arith.constant 0 : index
    %0 = vector.load %arg0[%c0, %c0_0] : memref<32x8xi32, #tpu.memory_space<vmem>>, vector<32x8xi32>
    %1 = vector.extract_strided_slice %0 {offsets = [0, 0], sizes = [32, 1], strides = [1, 1]} : vector<32x8xi32> to vector<32x1xi32>
    %2 = vector.extract_strided_slice %0 {offsets = [0, 1], sizes = [32, 1], strides = [1, 1]} : vector<32x8xi32> to vector<32x1xi32>
    %3 = vector.extract_strided_slice %0 {offsets = [0, 2], sizes = [32, 1], strides = [1, 1]} : vector<32x8xi32> to vector<32x1xi32>
    %4 = arith.sitofp %3 : vector<32x1xi32> to vector<32x1xf32>
    %5 = vector.extract_strided_slice %0 {offsets = [0, 3], sizes = [32, 1], strides = [1, 1]} : vector<32x8xi32> to vector<32x1xi32>
    %6 = arith.sitofp %5 : vector<32x1xi32> to vector<32x1xf32>
    %c0_1 = arith.constant 0 : index
    %c0_2 = arith.constant 0 : index
    %7 = vector.load %arg1[%c0_1, %c0_2] : memref<2x32xf32, #tpu.memory_space<vmem>>, vector<2x32xf32>
    %8 = vector.extract_strided_slice %7 {offsets = [0, 0], sizes = [1, 32], strides = [1, 1]} : vector<2x32xf32> to vector<1x32xf32>
    %9 = vector.extract_strided_slice %7 {offsets = [1, 0], sizes = [1, 32], strides = [1, 1]} : vector<2x32xf32> to vector<1x32xf32>
    %c0_3 = arith.constant 0 : index
    %c0_4 = arith.constant 0 : index
    %10 = vector.load %arg5[%c0_3, %c0_4] : memref<8x256xf32, #tpu.memory_space<vmem>>, vector<8x256xf32>
    %11 = vector.extract_strided_slice %10 {offsets = [0, 0], sizes = [1, 128], strides = [1, 1]} : vector<8x256xf32> to vector<1x128xf32>
    %12 = vector.extract_strided_slice %10 {offsets = [0, 128], sizes = [1, 128], strides = [1, 1]} : vector<8x256xf32> to vector<1x128xf32>
    %13 = vector.extract_strided_slice %10 {offsets = [1, 0], sizes = [1, 128], strides = [1, 1]} : vector<8x256xf32> to vector<1x128xf32>
    %14 = vector.extract_strided_slice %10 {offsets = [1, 128], sizes = [1, 128], strides = [1, 1]} : vector<8x256xf32> to vector<1x128xf32>
    %15 = vector.extract_strided_slice %10 {offsets = [2, 0], sizes = [1, 128], strides = [1, 1]} : vector<8x256xf32> to vector<1x128xf32>
    %16 = vector.extract_strided_slice %10 {offsets = [2, 128], sizes = [1, 128], strides = [1, 1]} : vector<8x256xf32> to vector<1x128xf32>
    %17 = vector.extract_strided_slice %10 {offsets = [3, 0], sizes = [1, 256], strides = [1, 1]} : vector<8x256xf32> to vector<1x256xf32>
    %18 = vector.extract_strided_slice %10 {offsets = [4, 0], sizes = [1, 128], strides = [1, 1]} : vector<8x256xf32> to vector<1x128xf32>
    %19 = vector.extract_strided_slice %10 {offsets = [4, 128], sizes = [1, 128], strides = [1, 1]} : vector<8x256xf32> to vector<1x128xf32>
    %20 = tpu.iota {dimensions = array<i32: 1>} : vector<32x128xi32>
    %21 = vector.broadcast %1 : vector<32x1xi32> to vector<32x128xi32>
    %22 = arith.cmpi eq, %20, %21 : vector<32x128xi32>
    %23 = arith.extui %22 : vector<32x128xi1> to vector<32x128xi32>
    %24 = arith.sitofp %23 : vector<32x128xi32> to vector<32x128xf32>
    %25 = arith.truncf %24 : vector<32x128xf32> to vector<32x128xbf16>
    %c0_5 = arith.constant 0 : index
    %c0_6 = arith.constant 0 : index
    %26 = vector.load %arg3[%c0_5, %c0_6] : memref<128x128xbf16, #tpu.memory_space<vmem>>, vector<128x128xbf16>
    %cst = arith.constant dense<0.000000e+00> : vector<32x128xf32>
    %27 = tpu.matmul %25, %26, %cst {dimension_numbers = #tpu.dot_dimension_numbers<[1], [0], [0], [1], [0, 0, 1, 1], [], []>} : vector<32x128xbf16>, vector<128x128xbf16>, vector<32x128xf32> -> vector<32x128xf32>
    %28 = vector.broadcast %6 : vector<32x1xf32> to vector<32x32xf32>
    %29 = vector.broadcast %9 : vector<1x32xf32> to vector<32x32xf32>
    %30 = arith.cmpf oeq, %28, %29 : vector<32x32xf32>
    %cst_7 = arith.constant 0.000000e+00 : f32
    %cst_8 = arith.constant -1.000000e+09 : f32
    %31 = vector.broadcast %cst_7 : f32 to vector<32x32xf32>
    %32 = vector.broadcast %cst_8 : f32 to vector<32x32xf32>
    %33 = arith.select %30, %31, %32 : vector<32x32xi1>, vector<32x32xf32>
    %34 = vector.broadcast %8 : vector<1x32xf32> to vector<32x32xf32>
    %35 = arith.addf %33, %34 : vector<32x32xf32>
    %cst_9 = arith.constant dense<0.000000e+00> : vector<32xf32>
    %36 = vector.multi_reduction <add>, %27, %cst_9 [1] : vector<32x128xf32> to vector<32xf32>
    %37 = vector.shape_cast %36 : vector<32xf32> to vector<32x1xf32>
    %cst_10 = arith.constant 1.280000e+02 : f32
    %38 = vector.broadcast %cst_10 : f32 to vector<32x1xf32>
    %39 = arith.divf %37, %38 : vector<32x1xf32>
    %40 = vector.broadcast %39 : vector<32x1xf32> to vector<32x128xf32>
    %41 = arith.subf %27, %40 : vector<32x128xf32>
    %42 = arith.mulf %41, %41 : vector<32x128xf32>
    %cst_11 = arith.constant dense<0.000000e+00> : vector<32xf32>
    %43 = vector.multi_reduction <add>, %42, %cst_11 [1] : vector<32x128xf32> to vector<32xf32>
    %44 = vector.shape_cast %43 : vector<32xf32> to vector<32x1xf32>
    %cst_12 = arith.constant 1.280000e+02 : f32
    %45 = vector.broadcast %cst_12 : f32 to vector<32x1xf32>
    %46 = arith.divf %44, %45 : vector<32x1xf32>
    %47 = vector.broadcast %39 : vector<32x1xf32> to vector<32x128xf32>
    %48 = arith.subf %27, %47 : vector<32x128xf32>
    %cst_13 = arith.constant 9.99999974E-6 : f32
    %49 = vector.broadcast %cst_13 : f32 to vector<32x1xf32>
    %50 = arith.addf %46, %49 : vector<32x1xf32>
    %51 = math.rsqrt %50 : vector<32x1xf32>
    %52 = vector.broadcast %51 : vector<32x1xf32> to vector<32x128xf32>
    %53 = arith.mulf %48, %52 : vector<32x128xf32>
    %54 = vector.broadcast %11 : vector<1x128xf32> to vector<32x128xf32>
    %55 = arith.mulf %53, %54 : vector<32x128xf32>
    %56 = vector.broadcast %12 : vector<1x128xf32> to vector<32x128xf32>
    %57 = arith.addf %55, %56 : vector<32x128xf32>
    %c0_14 = arith.constant 0 : index
    %c0_15 = arith.constant 0 : index
    %58 = vector.load %arg2[%c0_14, %c0_15] : memref<128x896xbf16, #tpu.memory_space<vmem>>, vector<128x384xbf16>
    %59 = arith.truncf %57 : vector<32x128xf32> to vector<32x128xbf16>
    %cst_16 = arith.constant dense<0.000000e+00> : vector<32x384xf32>
    %60 = tpu.matmul %59, %58, %cst_16 {dimension_numbers = #tpu.dot_dimension_numbers<[1], [0], [0], [1], [0, 0, 1, 1], [], []>} : vector<32x128xbf16>, vector<128x384xbf16>, vector<32x384xf32> -> vector<32x384xf32>
    %61 = vector.extract_strided_slice %60 {offsets = [0, 0], sizes = [32, 128], strides = [1, 1]} : vector<32x384xf32> to vector<32x128xf32>
    %62 = vector.extract_strided_slice %60 {offsets = [0, 128], sizes = [32, 128], strides = [1, 1]} : vector<32x384xf32> to vector<32x128xf32>
    %63 = vector.extract_strided_slice %60 {offsets = [0, 256], sizes = [32, 128], strides = [1, 1]} : vector<32x384xf32> to vector<32x128xf32>
    %64 = arith.truncf %61 : vector<32x128xf32> to vector<32x128xbf16>
    %65 = arith.truncf %62 : vector<32x128xf32> to vector<32x128xbf16>
    "tpu.trace_start"() <{level = 10 : i32, message = "qd,kd->qk"}> : () -> ()
    %cst_17 = arith.constant dense<0.000000e+00> : vector<32x32xf32>
    %66 = tpu.matmul %64, %65, %cst_17 {dimension_numbers = #tpu.dot_dimension_numbers<[1], [1], [0], [0], [0, 0, 1, 0], [], []>} : vector<32x128xbf16>, vector<32x128xbf16>, vector<32x32xf32> -> vector<32x32xf32>
    "tpu.trace_stop"() : () -> ()
    %67 = arith.addf %66, %35 : vector<32x32xf32>
    %cst_18 = arith.constant dense<0xFF800000> : vector<32xf32>
    %68 = vector.multi_reduction <maximumf>, %67, %cst_18 [1] : vector<32x32xf32> to vector<32xf32>
    %69 = vector.shape_cast %68 : vector<32xf32> to vector<32x1xf32>
    %70 = vector.broadcast %69 : vector<32x1xf32> to vector<32x32xf32>
    %71 = arith.subf %67, %70 : vector<32x32xf32>
    %72 = math.exp %71 : vector<32x32xf32>
    %cst_19 = arith.constant dense<0.000000e+00> : vector<32xf32>
    %73 = vector.multi_reduction <add>, %72, %cst_19 [1] : vector<32x32xf32> to vector<32xf32>
    %74 = vector.shape_cast %73 : vector<32xf32> to vector<32x1xf32>
    %75 = tpu.reciprocal %74 {approx = true} : vector<32x1xf32> -> vector<32x1xf32>
    %76 = vector.broadcast %75 : vector<32x1xf32> to vector<32x32xf32>
    %77 = arith.mulf %72, %76 : vector<32x32xf32>
    %78 = arith.truncf %63 : vector<32x128xf32> to vector<32x128xbf16>
    %79 = arith.truncf %77 : vector<32x32xf32> to vector<32x32xbf16>
    %cst_20 = arith.constant dense<0.000000e+00> : vector<32x128xf32>
    %80 = tpu.matmul %79, %78, %cst_20 {dimension_numbers = #tpu.dot_dimension_numbers<[1], [0], [0], [1], [0, 0, 1, 1], [], []>} : vector<32x32xbf16>, vector<32x128xbf16>, vector<32x128xf32> -> vector<32x128xf32>
    %c0_21 = arith.constant 0 : index
    %c384 = arith.constant 384 : index
    %81 = vector.load %arg2[%c0_21, %c384] : memref<128x896xbf16, #tpu.memory_space<vmem>>, vector<128x128xbf16>
    %82 = arith.truncf %80 : vector<32x128xf32> to vector<32x128xbf16>
    %cst_22 = arith.constant dense<0.000000e+00> : vector<32x128xf32>
    %83 = tpu.matmul %82, %81, %cst_22 {dimension_numbers = #tpu.dot_dimension_numbers<[1], [0], [0], [1], [0, 0, 1, 1], [], []>} : vector<32x128xbf16>, vector<128x128xbf16>, vector<32x128xf32> -> vector<32x128xf32>
    %84 = arith.addf %27, %83 : vector<32x128xf32>
    %cst_23 = arith.constant dense<0.000000e+00> : vector<32xf32>
    %85 = vector.multi_reduction <add>, %84, %cst_23 [1] : vector<32x128xf32> to vector<32xf32>
    %86 = vector.shape_cast %85 : vector<32xf32> to vector<32x1xf32>
    %cst_24 = arith.constant 1.280000e+02 : f32
    %87 = vector.broadcast %cst_24 : f32 to vector<32x1xf32>
    %88 = arith.divf %86, %87 : vector<32x1xf32>
    %89 = vector.broadcast %88 : vector<32x1xf32> to vector<32x128xf32>
    %90 = arith.subf %84, %89 : vector<32x128xf32>
    %91 = arith.mulf %90, %90 : vector<32x128xf32>
    %cst_25 = arith.constant dense<0.000000e+00> : vector<32xf32>
    %92 = vector.multi_reduction <add>, %91, %cst_25 [1] : vector<32x128xf32> to vector<32xf32>
    %93 = vector.shape_cast %92 : vector<32xf32> to vector<32x1xf32>
    %cst_26 = arith.constant 1.280000e+02 : f32
    %94 = vector.broadcast %cst_26 : f32 to vector<32x1xf32>
    %95 = arith.divf %93, %94 : vector<32x1xf32>
    %96 = vector.broadcast %88 : vector<32x1xf32> to vector<32x128xf32>
    %97 = arith.subf %84, %96 : vector<32x128xf32>
    %cst_27 = arith.constant 9.99999974E-6 : f32
    %98 = vector.broadcast %cst_27 : f32 to vector<32x1xf32>
    %99 = arith.addf %95, %98 : vector<32x1xf32>
    %100 = math.rsqrt %99 : vector<32x1xf32>
    %101 = vector.broadcast %100 : vector<32x1xf32> to vector<32x128xf32>
    %102 = arith.mulf %97, %101 : vector<32x128xf32>
    %103 = vector.broadcast %13 : vector<1x128xf32> to vector<32x128xf32>
    %104 = arith.mulf %102, %103 : vector<32x128xf32>
    %105 = vector.broadcast %14 : vector<1x128xf32> to vector<32x128xf32>
    %106 = arith.addf %104, %105 : vector<32x128xf32>
    %c0_28 = arith.constant 0 : index
    %c512 = arith.constant 512 : index
    %107 = vector.load %arg2[%c0_28, %c512] : memref<128x896xbf16, #tpu.memory_space<vmem>>, vector<128x256xbf16>
    %108 = arith.truncf %106 : vector<32x128xf32> to vector<32x128xbf16>
    %cst_29 = arith.constant dense<0.000000e+00> : vector<32x256xf32>
    %109 = tpu.matmul %108, %107, %cst_29 {dimension_numbers = #tpu.dot_dimension_numbers<[1], [0], [0], [1], [0, 0, 1, 1], [], []>} : vector<32x128xbf16>, vector<128x256xbf16>, vector<32x256xf32> -> vector<32x256xf32>
    %110 = vector.broadcast %17 : vector<1x256xf32> to vector<32x256xf32>
    %111 = arith.addf %109, %110 : vector<32x256xf32>
    %cst_30 = arith.constant 5.000000e-01 : f32
    %112 = vector.broadcast %cst_30 : f32 to vector<32x256xf32>
    %113 = arith.mulf %112, %111 : vector<32x256xf32>
    %cst_31 = arith.constant 4.471500e-02 : f32
    %114 = vector.broadcast %cst_31 : f32 to vector<32x256xf32>
    %115 = arith.mulf %114, %111 : vector<32x256xf32>
    %116 = arith.mulf %115, %111 : vector<32x256xf32>
    %117 = arith.mulf %116, %111 : vector<32x256xf32>
    %118 = arith.addf %111, %117 : vector<32x256xf32>
    %cst_32 = arith.constant 0.797884583 : f32
    %119 = vector.broadcast %cst_32 : f32 to vector<32x256xf32>
    %120 = arith.mulf %119, %118 : vector<32x256xf32>
    %121 = math.tanh %120 : vector<32x256xf32>
    %cst_33 = arith.constant 1.000000e+00 : f32
    %122 = vector.broadcast %cst_33 : f32 to vector<32x256xf32>
    %123 = arith.addf %122, %121 : vector<32x256xf32>
    %124 = arith.mulf %113, %123 : vector<32x256xf32>
    %c0_34 = arith.constant 0 : index
    %c0_35 = arith.constant 0 : index
    %125 = vector.load %arg4[%c0_34, %c0_35] : memref<256x128xbf16, #tpu.memory_space<vmem>>, vector<256x128xbf16>
    %126 = arith.truncf %124 : vector<32x256xf32> to vector<32x256xbf16>
    %cst_36 = arith.constant dense<0.000000e+00> : vector<32x128xf32>
    %127 = tpu.matmul %126, %125, %cst_36 {dimension_numbers = #tpu.dot_dimension_numbers<[1], [0], [0], [1], [0, 0, 1, 1], [], []>} : vector<32x256xbf16>, vector<256x128xbf16>, vector<32x128xf32> -> vector<32x128xf32>
    %128 = arith.addf %84, %127 : vector<32x128xf32>
    %129 = vector.broadcast %18 : vector<1x128xf32> to vector<32x128xf32>
    %130 = arith.addf %128, %129 : vector<32x128xf32>
    %cst_37 = arith.constant dense<0.000000e+00> : vector<32xf32>
    %131 = vector.multi_reduction <add>, %130, %cst_37 [1] : vector<32x128xf32> to vector<32xf32>
    %132 = vector.shape_cast %131 : vector<32xf32> to vector<32x1xf32>
    %cst_38 = arith.constant 1.280000e+02 : f32
    %133 = vector.broadcast %cst_38 : f32 to vector<32x1xf32>
    %134 = arith.divf %132, %133 : vector<32x1xf32>
    %135 = vector.broadcast %134 : vector<32x1xf32> to vector<32x128xf32>
    %136 = arith.subf %130, %135 : vector<32x128xf32>
    %137 = arith.mulf %136, %136 : vector<32x128xf32>
    %cst_39 = arith.constant dense<0.000000e+00> : vector<32xf32>
    %138 = vector.multi_reduction <add>, %137, %cst_39 [1] : vector<32x128xf32> to vector<32xf32>
    %139 = vector.shape_cast %138 : vector<32xf32> to vector<32x1xf32>
    %cst_40 = arith.constant 1.280000e+02 : f32
    %140 = vector.broadcast %cst_40 : f32 to vector<32x1xf32>
    %141 = arith.divf %139, %140 : vector<32x1xf32>
    %142 = vector.broadcast %134 : vector<32x1xf32> to vector<32x128xf32>
    %143 = arith.subf %130, %142 : vector<32x128xf32>
    %cst_41 = arith.constant 9.99999974E-6 : f32
    %144 = vector.broadcast %cst_41 : f32 to vector<32x1xf32>
    %145 = arith.addf %141, %144 : vector<32x1xf32>
    %146 = math.rsqrt %145 : vector<32x1xf32>
    %147 = vector.broadcast %146 : vector<32x1xf32> to vector<32x128xf32>
    %148 = arith.mulf %143, %147 : vector<32x128xf32>
    %149 = vector.broadcast %15 : vector<1x128xf32> to vector<32x128xf32>
    %150 = arith.mulf %148, %149 : vector<32x128xf32>
    %151 = vector.broadcast %16 : vector<1x128xf32> to vector<32x128xf32>
    %152 = arith.addf %150, %151 : vector<32x128xf32>
    %c0_42 = arith.constant 0 : index
    %c768 = arith.constant 768 : index
    %153 = vector.load %arg2[%c0_42, %c768] : memref<128x896xbf16, #tpu.memory_space<vmem>>, vector<128x128xbf16>
    %154 = arith.truncf %152 : vector<32x128xf32> to vector<32x128xbf16>
    %cst_43 = arith.constant dense<0.000000e+00> : vector<32x128xf32>
    %155 = tpu.matmul %154, %153, %cst_43 {dimension_numbers = #tpu.dot_dimension_numbers<[1], [0], [0], [1], [0, 0, 1, 1], [], []>} : vector<32x128xbf16>, vector<128x128xbf16>, vector<32x128xf32> -> vector<32x128xf32>
    %156 = vector.broadcast %19 : vector<1x128xf32> to vector<32x128xf32>
    %157 = arith.addf %155, %156 : vector<32x128xf32>
    %158 = tpu.iota {dimensions = array<i32: 1>} : vector<32x128xi32>
    %c32_i32 = arith.constant 32 : i32
    %159 = vector.broadcast %c32_i32 : i32 to vector<32x128xi32>
    %160 = arith.cmpi slt, %158, %159 : vector<32x128xi32>
    %cst_44 = arith.constant -1.000000e+09 : f32
    %161 = vector.broadcast %cst_44 : f32 to vector<32x128xf32>
    %162 = arith.select %160, %157, %161 : vector<32x128xi1>, vector<32x128xf32>
    %cst_45 = arith.constant dense<0xFF800000> : vector<32xf32>
    %163 = vector.multi_reduction <maximumf>, %162, %cst_45 [1] : vector<32x128xf32> to vector<32xf32>
    %164 = vector.shape_cast %163 : vector<32xf32> to vector<32x1xf32>
    %165 = vector.broadcast %164 : vector<32x1xf32> to vector<32x128xf32>
    %166 = arith.subf %162, %165 : vector<32x128xf32>
    %167 = math.exp %166 : vector<32x128xf32>
    %cst_46 = arith.constant dense<0.000000e+00> : vector<32xf32>
    %168 = vector.multi_reduction <add>, %167, %cst_46 [1] : vector<32x128xf32> to vector<32xf32>
    %169 = vector.shape_cast %168 : vector<32xf32> to vector<32x1xf32>
    %170 = math.log %169 : vector<32x1xf32>
    %171 = arith.addf %170, %164 : vector<32x1xf32>
    %172 = vector.broadcast %2 : vector<32x1xi32> to vector<32x128xi32>
    %173 = arith.cmpi eq, %158, %172 : vector<32x128xi32>
    %cst_47 = arith.constant 0.000000e+00 : f32
    %174 = vector.broadcast %cst_47 : f32 to vector<32x128xf32>
    %175 = arith.select %173, %162, %174 : vector<32x128xi1>, vector<32x128xf32>
    %cst_48 = arith.constant dense<0.000000e+00> : vector<32xf32>
    %176 = vector.multi_reduction <add>, %175, %cst_48 [1] : vector<32x128xf32> to vector<32xf32>
    %177 = vector.shape_cast %176 : vector<32xf32> to vector<32x1xf32>
    %178 = arith.subf %171, %177 : vector<32x1xf32>
    %179 = arith.mulf %178, %4 : vector<32x1xf32>
    %180 = vector.shape_cast %179 : vector<32x1xf32> to vector<1x32x1xf32>
    %cst_49 = arith.constant dense<0.000000e+00> : vector<1xf32>
    %181 = vector.multi_reduction <add>, %180, %cst_49 [1, 2] : vector<1x32x1xf32> to vector<1xf32>
    %182 = vector.shape_cast %181 : vector<1xf32> to vector<1x1x1xf32>
    %183 = vector.extract %182[0, 0, 0] : f32 from vector<1x1x1xf32>
    %184 = vector.shape_cast %4 : vector<32x1xf32> to vector<1x32x1xf32>
    %cst_50 = arith.constant dense<0.000000e+00> : vector<1xf32>
    %185 = vector.multi_reduction <add>, %184, %cst_50 [1, 2] : vector<1x32x1xf32> to vector<1xf32>
    %186 = vector.shape_cast %185 : vector<1xf32> to vector<1x1x1xf32>
    %187 = vector.extract %186[0, 0, 0] : f32 from vector<1x1x1xf32>
    %cst_51 = arith.constant 1.000000e+00 : f32
    %188 = arith.maximumf %187, %cst_51 : f32
    %189 = arith.divf %183, %188 : f32
    %c0_52 = arith.constant 0 : index
    %c0_53 = arith.constant 0 : index
    %190 = memref.load %arg6[%c0_52, %c0_53] : memref<1x1xf32, #tpu.memory_space<smem>>
    memref.store %189, %arg6[%c0_52, %c0_53] : memref<1x1xf32, #tpu.memory_space<smem>>
    return
  }
}

</mosaic_0001>

<llo_original>
// kernel: maskgit_forward.3
$region0: #{maskgit_forward.3}
  #allocation0 [shape = 'u32[]', space=smem, size = 0x4, offset = 0x4, fixed_abs, tag = 'smem constant byte address 0x4 - core index']
  #allocation1 [shape = 'u32[144,128]{1,0:T(1,128)}', space=vmem, size = 0x12000, scoped, tag = 'internal scratch']
  %s0 = inlined_call_operand.vmem [shape: s32[32,8], index: 0, kind: input, shape index: {}]
  %s1 = inlined_call_operand.vmem [shape: f32[2,32], index: 1, kind: input, shape index: {}]
  %s2 = inlined_call_operand.vmem [shape: bf16[128,896], index: 2, kind: input, shape index: {}]
  %s3 = inlined_call_operand.vmem [shape: bf16[128,128], index: 3, kind: input, shape index: {}]
  %s4 = inlined_call_operand.vmem [shape: bf16[256,128], index: 4, kind: input, shape index: {}]
  %s5 = inlined_call_operand.vmem [shape: f32[8,256], index: 5, kind: input, shape index: {}]
  %s6 = inlined_call_operand.hbm [shape: f32[1,1], index: 6, kind: output, shape index: {}]
  %s7 = sld [smem:[#allocation0]]
  $region34: #{maskgit_forward.3} parent=0
    _
  %s9 = ssub.s32 1, %s7
  %s10 = scalar_select 0, %s9, %s7
  $region1: #{maskgit_forward.3} parent=0
    #allocation2 [shape = 'u8[512]{0}', space=smem, size = 0x200, scoped, tag = 'output window, operand 0, single buffered']
    #allocation3 [shape = 's32[1]{0}', space=sflag, size = 0x4, scoped, tag = 'scoped memory for maskgit_forward.3']
    %11 = vsyncpa [#allocation3], 0
    // Predicated region
    $region2: #{maskgit_forward.3} parent=1 // pred_check
      _
    $region3: #{maskgit_forward.3} parent=1 // pred_check_branch
      %13 = sbr.rel (0) target = $region5
    $region4: #{maskgit_forward.3} parent=1 // pred_region
      _
    $region5: #{maskgit_forward.3} parent=1 // pred_fallthru
      _
    // Predicated region
    $region6: #{maskgit_forward.3} parent=1 // pred_check
      _
    $region7: #{maskgit_forward.3} parent=1 // pred_check_branch
      %15 = sbr.rel (0) target = $region9
    $region8: #{maskgit_forward.3} parent=1 // pred_region
      _
    $region9: #{maskgit_forward.3} parent=1 // pred_fallthru
      _
    // Predicated region
    $region10: #{maskgit_forward.3} parent=1 // pred_check
      _
    $region11: #{maskgit_forward.3} parent=1 // pred_check_branch
      %17 = sbr.rel (0) target = $region13
    $region12: #{maskgit_forward.3} parent=1 // pred_region
      _
    $region13: #{maskgit_forward.3} parent=1 // pred_fallthru
      _
    // Predicated region
    $region14: #{maskgit_forward.3} parent=1 // pred_check
      _
    $region15: #{maskgit_forward.3} parent=1 // pred_check_branch
      %19 = sbr.rel (0) target = $region17
    $region16: #{maskgit_forward.3} parent=1 // pred_region
      _
    $region17: #{maskgit_forward.3} parent=1 // pred_fallthru
      _
    // Predicated region
    $region18: #{maskgit_forward.3} parent=1 // pred_check
      _
    $region19: #{maskgit_forward.3} parent=1 // pred_check_branch
      %21 = sbr.rel (0) target = $region21
    $region20: #{maskgit_forward.3} parent=1 // pred_region
      _
    $region21: #{maskgit_forward.3} parent=1 // pred_fallthru
      _
    // Predicated region
    $region22: #{maskgit_forward.3} parent=1 // pred_check
      _
    $region23: #{maskgit_forward.3} parent=1 // pred_check_branch
      %23 = sbr.rel (0) target = $region25
    $region24: #{maskgit_forward.3} parent=1 // pred_region
      _
    $region25: #{maskgit_forward.3} parent=1 // pred_fallthru
      _
    %v25 = vld [vmem:[%s0] sm:$0xff]
    %v26 = vld [vmem:[%s0 + $0x8] sm:$0xff]
    %v27 = vld [vmem:[%s0 + $0x10] sm:$0xff]
    %v28 = vld [vmem:[%s0 + $0x18] sm:$0xff]
    %v29 = vcvt.s32.f32 %v25
    %v30 = vcvt.s32.f32 %v26
    %v31 = vcvt.s32.f32 %v27
    %v32 = vcvt.s32.f32 %v28
    %v33 = vld [vmem:[%s1] sm:$0x3]
    %v34 = vld [vmem:[%s5] sm:$0xff]
    %v35 = vld [vmem:[%s5 + $0x8] sm:$0xff]
    %v36 = vlaneseq
    %v37 = vand.u32 %v36, 127
    %38 = vset.pattern.permute.xlu0 0
    %39 = vperm.xlu0 %38, %v25
    %v40 = vpop.permute.xlu0 %39
    %41 = vset.pattern.permute.xlu0 0
    %42 = vperm.xlu0 %41, %v26
    %v43 = vpop.permute.xlu0 %42
    %44 = vset.pattern.permute.xlu0 0
    %45 = vperm.xlu0 %44, %v27
    %v46 = vpop.permute.xlu0 %45
    %47 = vset.pattern.permute.xlu0 0
    %48 = vperm.xlu0 %47, %v28
    %v49 = vpop.permute.xlu0 %48
    %vm50 = vcmp.eq.s32.totalorder %v37, %v40
    %vm51 = vcmp.eq.s32.totalorder %v37, %v43
    %vm52 = vcmp.eq.s32.totalorder %v37, %v46
    %vm53 = vcmp.eq.s32.totalorder %v37, %v49
    %v54 = vsel %vm50, 1, 0
    %v55 = vsel %vm51, 1, 0
    %v56 = vsel %vm52, 1, 0
    %v57 = vsel %vm53, 1, 0
    %v58 = vcvt.s32.f32 %v54
    %v59 = vcvt.s32.f32 %v55
    %v60 = vcvt.s32.f32 %v56
    %v61 = vcvt.s32.f32 %v57
    %v62 = vpack.c.bf16 %v59, %v58
    %v63 = vpack.c.bf16 %v61, %v60
    %v64 = vld [vmem:[%s3] sm:$0xf]
    %v65 = vld [vmem:[%s3 + $0x4] sm:$0xf]
    %v66 = vld [vmem:[%s3 + $0x8] sm:$0xf]
    %v67 = vld [vmem:[%s3 + $0xc] sm:$0xf]
    %v68 = vld [vmem:[%s3 + $0x10] sm:$0xf]
    %v69 = vld [vmem:[%s3 + $0x14] sm:$0xf]
    %v70 = vld [vmem:[%s3 + $0x18] sm:$0xf]
    %v71 = vld [vmem:[%s3 + $0x1c] sm:$0xf]
    %v72 = vld [vmem:[%s3 + $0x20] sm:$0xf]
    %v73 = vld [vmem:[%s3 + $0x24] sm:$0xf]
    %v74 = vld [vmem:[%s3 + $0x28] sm:$0xf]
    %v75 = vld [vmem:[%s3 + $0x2c] sm:$0xf]
    %v76 = vld [vmem:[%s3 + $0x30] sm:$0xf]
    %v77 = vld [vmem:[%s3 + $0x34] sm:$0xf]
    %v78 = vld [vmem:[%s3 + $0x38] sm:$0xf]
    %v79 = vld [vmem:[%s3 + $0x3c] sm:$0xf]
    %v96 = vunpack.c.l.b16 %v64
    %v97 = vunpack.c.l.b16 %v65
    %v98 = vunpack.c.l.b16 %v66
    %v99 = vunpack.c.l.b16 %v67
    %v100 = vunpack.c.l.b16 %v68
    %v101 = vunpack.c.l.b16 %v69
    %v102 = vunpack.c.l.b16 %v70
    %v103 = vunpack.c.l.b16 %v71
    %v104 = vunpack.c.l.b16 %v72
    %v105 = vunpack.c.l.b16 %v73
    %v106 = vunpack.c.l.b16 %v74
    %v107 = vunpack.c.l.b16 %v75
    %v108 = vunpack.c.l.b16 %v76
    %v109 = vunpack.c.l.b16 %v77
    %v110 = vunpack.c.l.b16 %v78
    %v111 = vunpack.c.l.b16 %v79
    %v112 = vpack.c.b16 %v97, %v96
    %v113 = vpack.c.b16 %v99, %v98
    %v114 = vpack.c.b16 %v101, %v100
    %v115 = vpack.c.b16 %v103, %v102
    %v116 = vpack.c.b16 %v105, %v104
    %v117 = vpack.c.b16 %v107, %v106
    %v118 = vpack.c.b16 %v109, %v108
    %v119 = vpack.c.b16 %v111, %v110
    %128 = vmatprep.subr.bf16.mxu0 0
    %129 = vmatpush1.bf16.msra.mxu0 %v119
    %130 = vmatprep.subr.bf16.mxu0 0
    %131 = vmatpush1.bf16.msra.mxu0 %v118
    %132 = vmatprep.subr.bf16.mxu0 0
    %133 = vmatpush1.bf16.msra.mxu0 %v117
    %134 = vmatprep.subr.bf16.mxu0 0
    %135 = vmatpush1.bf16.msra.mxu0 %v116
    %136 = vmatprep.subr.bf16.mxu0 0
    %137 = vmatpush1.bf16.msra.mxu0 %v115
    %138 = vmatprep.subr.bf16.mxu0 0
    %139 = vmatpush1.bf16.msra.mxu0 %v114
    %140 = vmatprep.subr.bf16.mxu0 0
    %141 = vmatpush1.bf16.msra.mxu0 %v113
    %142 = vmatprep.subr.bf16.mxu0 0
    %143 = vmatpush1.bf16.msra.mxu0 %v112
    %144 = vmatprep.subr.bf16.mxu0 0
    %145 = vmatpush2.bf16.msra.mxu0 0
    %146 = vmatprep.subr.bf16.mxu0 0
    %147 = vmatpush2.bf16.msra.mxu0 0
    %148 = vmatprep.subr.bf16.mxu0 0
    %149 = vmatpush2.bf16.msra.mxu0 0
    %150 = vmatprep.subr.bf16.mxu0 0
    %151 = vmatpush2.bf16.msra.mxu0 0
    %152 = vmatprep.subr.bf16.mxu0 0
    %153 = vmatpush2.bf16.msra.mxu0 0
    %154 = vmatprep.subr.bf16.mxu0 0
    %155 = vmatpush2.bf16.msra.mxu0 0
    %156 = vmatprep.subr.bf16.mxu0 0
    %157 = vmatpush2.bf16.msra.mxu0 0
    %158 = vmatprep.subr.bf16.mxu0 0
    %159 = vmatpush2.bf16.msra.mxu0 0
    %160 = vmatprep.mubr.bf16.mxu0 0
    %161 = vmatmul.mubr.bf16.gmra.mxu0 %v62
    %v162 = vpop.f32.mrf.mxu0
    %v163 = vadd.f32 0.0, %v162
    %v164 = vpop.f32.mrf.mxu0
    %v165 = vpop.f32.mrf.mxu0
    %v166 = vadd.f32 0.0, %v165
    %v167 = vpop.f32.mrf.mxu0
    %168 = vmatprep.mubr.bf16.mxu0 0
    %169 = vmatmul.mubr.bf16.gmra.mxu0 %v63
    %v170 = vpop.f32.mrf.mxu0
    %v171 = vadd.f32 0.0, %v170
    %v172 = vpop.f32.mrf.mxu0
    %v173 = vpop.f32.mrf.mxu0
    %v174 = vadd.f32 0.0, %v173
    %v175 = vpop.f32.mrf.mxu0
    %176 = vdwg.mxu0
    %178 = vset.pattern.permute.xlu0 3
    %179 = vperm.xlu0 %178, %v29
    %v180 = vpop.permute.xlu0 %179
    %183 = vset.pattern.permute.xlu0 3
    %184 = vperm.xlu0 %183, %v30
    %v185 = vpop.permute.xlu0 %184
    %188 = vset.pattern.permute.xlu0 3
    %189 = vperm.xlu0 %188, %v31
    %v190 = vpop.permute.xlu0 %189
    %193 = vset.pattern.permute.xlu0 3
    %194 = vperm.xlu0 %193, %v32
    %v195 = vpop.permute.xlu0 %194
    %v197 = vlaneseq
    %v198 = vshrl.u32 %v197, 7
    %v199 = vsub.s32 1, %v198
    %v200 = vrot.slane %v33, %v199
    %vm201 = vcmp.eq.f32.partialorder %v180, %v200
    %vm202 = vcmp.eq.f32.partialorder %v185, %v200
    %vm203 = vcmp.eq.f32.partialorder %v190, %v200
    %vm204 = vcmp.eq.f32.partialorder %v195, %v200
    %v205 = vsel %vm201, 0.0, -1e+09
    %v206 = vsel %vm202, 0.0, -1e+09
    %v207 = vsel %vm203, 0.0, -1e+09
    %v208 = vsel %vm204, 0.0, -1e+09
    %v209 = vlaneseq
    %v210 = vshrl.u32 %v209, 7
    %v211 = vsub.s32 0, %v210
    %v212 = vrot.slane %v33, %v211
    %v213 = vadd.f32 %v205, %v212
    %v214 = vadd.f32 %v206, %v212
    %v215 = vadd.f32 %v207, %v212
    %v216 = vadd.f32 %v208, %v212
    %217 = vadd.xlane.f32.xlu0 %v163
    %v218 = vpop.xlane.xlu0 %217
    %219 = vadd.xlane.f32.xlu0 %v166
    %v220 = vpop.xlane.xlu0 %219
    %221 = vadd.xlane.f32.xlu0 %v171
    %v222 = vpop.xlane.xlu0 %221
    %223 = vadd.xlane.f32.xlu0 %v174
    %v224 = vpop.xlane.xlu0 %223
    %v225 = vrcp.pop 128.0
    %v226 = vmul.f32 %v218, %v225
    %v227 = vmul.f32 %v220, %v225
    %v228 = vmul.f32 %v222, %v225
    %v229 = vmul.f32 %v224, %v225
    %v230 = vsub.f32 %v163, %v226
    %v231 = vsub.f32 %v166, %v227
    %v232 = vsub.f32 %v171, %v228
    %v233 = vsub.f32 %v174, %v229
    %v234 = vmul.f32 %v230, %v230
    %v235 = vmul.f32 %v231, %v231
    %v236 = vmul.f32 %v232, %v232
    %v237 = vmul.f32 %v233, %v233
    %238 = vadd.xlane.f32.xlu0 %v234
    %v239 = vpop.xlane.xlu0 %238
    %240 = vadd.xlane.f32.xlu0 %v235
    %v241 = vpop.xlane.xlu0 %240
    %242 = vadd.xlane.f32.xlu0 %v236
    %v243 = vpop.xlane.xlu0 %242
    %244 = vadd.xlane.f32.xlu0 %v237
    %v245 = vpop.xlane.xlu0 %244
    %v246 = vmul.f32 %v239, %v225
    %v247 = vmul.f32 %v241, %v225
    %v248 = vmul.f32 %v243, %v225
    %v249 = vmul.f32 %v245, %v225
    %v250 = vadd.f32 %v246, 1e-05
    %v251 = vadd.f32 %v247, 1e-05
    %v252 = vadd.f32 %v248, 1e-05
    %v253 = vadd.f32 %v249, 1e-05
    %v254 = vrsqrt.pop %v250
    %v255 = vrsqrt.pop %v251
    %v256 = vrsqrt.pop %v252
    %v257 = vrsqrt.pop %v253
    %v258 = vmul.f32 %v230, %v254
    %v259 = vmul.f32 %v231, %v255
    %v260 = vmul.f32 %v232, %v256
    %v261 = vmul.f32 %v233, %v257
    %v262 = vlaneseq
    %v263 = vshrl.u32 %v262, 7
    %v264 = vsub.s32 0, %v263
    %v265 = vrot.slane %v34, %v264
    %v266 = vmul.f32 %v258, %v265
    %v267 = vmul.f32 %v259, %v265
    %v268 = vmul.f32 %v260, %v265
    %v269 = vmul.f32 %v261, %v265
    %v270 = vlaneseq
    %v271 = vshrl.u32 %v270, 7
    %v272 = vsub.s32 0, %v271
    %v273 = vrot.slane %v35, %v272
    %v274 = vadd.f32 %v266, %v273
    %v275 = vadd.f32 %v267, %v273
    %v276 = vadd.f32 %v268, %v273
    %v277 = vadd.f32 %v269, %v273
    %v278 = vld [vmem:[%s2] sm:$0xff]
    %v279 = vld [vmem:[%s2 + $0x8] sm:$0xf]
    %v280 = vld [vmem:[%s2 + $0x1c] sm:$0xff]
    %v281 = vld [vmem:[%s2 + $0x24] sm:$0xf]
    %v282 = vld [vmem:[%s2 + $0x38] sm:$0xff]
    %v283 = vld [vmem:[%s2 + $0x40] sm:$0xf]
    %v284 = vld [vmem:[%s2 + $0x54] sm:$0xff]
    %v285 = vld [vmem:[%s2 + $0x5c] sm:$0xf]
    %v286 = vld [vmem:[%s2 + $0x70] sm:$0xff]
    %v287 = vld [vmem:[%s2 + $0x78] sm:$0xf]
    %v288 = vld [vmem:[%s2 + $0x8c] sm:$0xff]
    %v289 = vld [vmem:[%s2 + $0x94] sm:$0xf]
    %v290 = vld [vmem:[%s2 + $0xa8] sm:$0xff]
    %v291 = vld [vmem:[%s2 + $0xb0] sm:$0xf]
    %v292 = vld [vmem:[%s2 + $0xc4] sm:$0xff]
    %v293 = vld [vmem:[%s2 + $0xcc] sm:$0xf]
    %v294 = vld [vmem:[%s2 + $0xe0] sm:$0xff]
    %v295 = vld [vmem:[%s2 + $0xe8] sm:$0xf]
    %v296 = vld [vmem:[%s2 + $0xfc] sm:$0xff]
    %v297 = vld [vmem:[%s2 + $0x104] sm:$0xf]
    %v298 = vld [vmem:[%s2 + $0x118] sm:$0xff]
    %v299 = vld [vmem:[%s2 + $0x120] sm:$0xf]
    %v300 = vld [vmem:[%s2 + $0x134] sm:$0xff]
    %v301 = vld [vmem:[%s2 + $0x13c] sm:$0xf]
    %v302 = vld [vmem:[%s2 + $0x150] sm:$0xff]
    %v303 = vld [vmem:[%s2 + $0x158] sm:$0xf]
    %v304 = vld [vmem:[%s2 + $0x16c] sm:$0xff]
    %v305 = vld [vmem:[%s2 + $0x174] sm:$0xf]
    %v306 = vld [vmem:[%s2 + $0x188] sm:$0xff]
    %v307 = vld [vmem:[%s2 + $0x190] sm:$0xf]
    %v308 = vld [vmem:[%s2 + $0x1a4] sm:$0xff]
    %v309 = vld [vmem:[%s2 + $0x1ac] sm:$0xf]
    %v310 = vpack.c.bf16 %v275, %v274
    %v311 = vpack.c.bf16 %v277, %v276
    %v344 = vunpack.c.l.b16 %v278
    %v345 = vunpack.c.h.b16 %v278
    %v346 = vunpack.c.l.b16 %v279
    %v347 = vunpack.c.l.b16 %v280
    %v348 = vunpack.c.h.b16 %v280
    %v349 = vunpack.c.l.b16 %v281
    %v350 = vunpack.c.l.b16 %v282
    %v351 = vunpack.c.h.b16 %v282
    %v352 = vunpack.c.l.b16 %v283
    %v353 = vunpack.c.l.b16 %v284
    %v354 = vunpack.c.h.b16 %v284
    %v355 = vunpack.c.l.b16 %v285
    %v356 = vunpack.c.l.b16 %v286
    %v357 = vunpack.c.h.b16 %v286
    %v358 = vunpack.c.l.b16 %v287
    %v359 = vunpack.c.l.b16 %v288
    %v360 = vunpack.c.h.b16 %v288
    %v361 = vunpack.c.l.b16 %v289
    %v362 = vunpack.c.l.b16 %v290
    %v363 = vunpack.c.h.b16 %v290
    %v364 = vunpack.c.l.b16 %v291
    %v365 = vunpack.c.l.b16 %v292
    %v366 = vunpack.c.h.b16 %v292
    %v367 = vunpack.c.l.b16 %v293
    %v368 = vunpack.c.l.b16 %v294
    %v369 = vunpack.c.h.b16 %v294
    %v370 = vunpack.c.l.b16 %v295
    %v371 = vunpack.c.l.b16 %v296
    %v372 = vunpack.c.h.b16 %v296
    %v373 = vunpack.c.l.b16 %v297
    %v374 = vunpack.c.l.b16 %v298
    %v375 = vunpack.c.h.b16 %v298
    %v376 = vunpack.c.l.b16 %v299
    %v377 = vunpack.c.l.b16 %v300
    %v378 = vunpack.c.h.b16 %v300
    %v379 = vunpack.c.l.b16 %v301
    %v380 = vunpack.c.l.b16 %v302
    %v381 = vunpack.c.h.b16 %v302
    %v382 = vunpack.c.l.b16 %v303
    %v383 = vunpack.c.l.b16 %v304
    %v384 = vunpack.c.h.b16 %v304
    %v385 = vunpack.c.l.b16 %v305
    %v386 = vunpack.c.l.b16 %v306
    %v387 = vunpack.c.h.b16 %v306
    %v388 = vunpack.c.l.b16 %v307
    %v389 = vunpack.c.l.b16 %v308
    %v390 = vunpack.c.h.b16 %v308
    %v391 = vunpack.c.l.b16 %v309
    %v392 = vpack.c.b16 %v347, %v344
    %v393 = vpack.c.b16 %v348, %v345
    %v394 = vpack.c.b16 %v349, %v346
    %v395 = vpack.c.b16 %v353, %v350
    %v396 = vpack.c.b16 %v354, %v351
    %v397 = vpack.c.b16 %v355, %v352
    %v398 = vpack.c.b16 %v359, %v356
    %v399 = vpack.c.b16 %v360, %v357
    %v400 = vpack.c.b16 %v361, %v358
    %v401 = vpack.c.b16 %v365, %v362
    %v402 = vpack.c.b16 %v366, %v363
    %v403 = vpack.c.b16 %v367, %v364
    %v404 = vpack.c.b16 %v371, %v368
    %v405 = vpack.c.b16 %v372, %v369
    %v406 = vpack.c.b16 %v373, %v370
    %v407 = vpack.c.b16 %v377, %v374
    %v408 = vpack.c.b16 %v378, %v375
    %v409 = vpack.c.b16 %v379, %v376
    %v410 = vpack.c.b16 %v383, %v380
    %v411 = vpack.c.b16 %v384, %v381
    %v412 = vpack.c.b16 %v385, %v382
    %v413 = vpack.c.b16 %v389, %v386
    %v414 = vpack.c.b16 %v390, %v387
    %v415 = vpack.c.b16 %v391, %v388
    %440 = vmatprep.subr.bf16.mxu0 %v414
    %441 = vmatpush1.bf16.msra.mxu0 %v413
    %442 = vmatprep.subr.bf16.mxu0 %v411
    %443 = vmatpush1.bf16.msra.mxu0 %v410
    %444 = vmatprep.subr.bf16.mxu0 %v408
    %445 = vmatpush1.bf16.msra.mxu0 %v407
    %446 = vmatprep.subr.bf16.mxu0 %v405
    %447 = vmatpush1.bf16.msra.mxu0 %v404
    %448 = vmatprep.subr.bf16.mxu0 %v402
    %449 = vmatpush1.bf16.msra.mxu0 %v401
    %450 = vmatprep.subr.bf16.mxu0 %v399
    %451 = vmatpush1.bf16.msra.mxu0 %v398
    %452 = vmatprep.subr.bf16.mxu0 %v396
    %453 = vmatpush1.bf16.msra.mxu0 %v395
    %454 = vmatprep.subr.bf16.mxu0 %v393
    %455 = vmatpush1.bf16.msra.mxu0 %v392
    %456 = vmatprep.subr.bf16.mxu0 0
    %457 = vmatpush2.bf16.msra.mxu0 0
    %458 = vmatprep.subr.bf16.mxu0 0
    %459 = vmatpush2.bf16.msra.mxu0 0
    %460 = vmatprep.subr.bf16.mxu0 0
    %461 = vmatpush2.bf16.msra.mxu0 0
    %462 = vmatprep.subr.bf16.mxu0 0
    %463 = vmatpush2.bf16.msra.mxu0 0
    %464 = vmatprep.subr.bf16.mxu0 0
    %465 = vmatpush2.bf16.msra.mxu0 0
    %466 = vmatprep.subr.bf16.mxu0 0
    %467 = vmatpush2.bf16.msra.mxu0 0
    %468 = vmatprep.subr.bf16.mxu0 0
    %469 = vmatpush2.bf16.msra.mxu0 0
    %470 = vmatprep.subr.bf16.mxu0 0
    %471 = vmatpush2.bf16.msra.mxu0 0
    %472 = vmatprep.mubr.bf16.mxu0 0
    %473 = vmatmul.mubr.bf16.gmra.mxu0 %v310
    %v474 = vpop.f32.mrf.mxu0
    %v475 = vadd.f32 0.0, %v474
    %v476 = vpop.f32.mrf.mxu0
    %v477 = vadd.f32 0.0, %v476
    %v478 = vpop.f32.mrf.mxu0
    %v479 = vadd.f32 0.0, %v478
    %v480 = vpop.f32.mrf.mxu0
    %v481 = vadd.f32 0.0, %v480
    %482 = vmatprep.mubr.bf16.mxu0 0
    %483 = vmatmul.mubr.bf16.gmra.mxu0 %v311
    %v484 = vpop.f32.mrf.mxu0
    %v485 = vadd.f32 0.0, %v484
    %v486 = vpop.f32.mrf.mxu0
    %v487 = vadd.f32 0.0, %v486
    %v488 = vpop.f32.mrf.mxu0
    %v489 = vadd.f32 0.0, %v488
    %v490 = vpop.f32.mrf.mxu0
    %v491 = vadd.f32 0.0, %v490
    %492 = vdwg.mxu0
    %493 = vmatprep.subr.bf16.mxu0 0
    %494 = vmatpush1.bf16.msra.mxu0 %v415
    %495 = vmatprep.subr.bf16.mxu0 0
    %496 = vmatpush1.bf16.msra.mxu0 %v412
    %497 = vmatprep.subr.bf16.mxu0 0
    %498 = vmatpush1.bf16.msra.mxu0 %v409
    %499 = vmatprep.subr.bf16.mxu0 0
    %500 = vmatpush1.bf16.msra.mxu0 %v406
    %501 = vmatprep.subr.bf16.mxu0 0
    %502 = vmatpush1.bf16.msra.mxu0 %v403
    %503 = vmatprep.subr.bf16.mxu0 0
    %504 = vmatpush1.bf16.msra.mxu0 %v400
    %505 = vmatprep.subr.bf16.mxu0 0
    %506 = vmatpush1.bf16.msra.mxu0 %v397
    %507 = vmatprep.subr.bf16.mxu0 0
    %508 = vmatpush1.bf16.msra.mxu0 %v394
    %509 = vmatprep.subr.bf16.mxu0 0
    %510 = vmatpush2.bf16.msra.mxu0 0
    %511 = vmatprep.subr.bf16.mxu0 0
    %512 = vmatpush2.bf16.msra.mxu0 0
    %513 = vmatprep.subr.bf16.mxu0 0
    %514 = vmatpush2.bf16.msra.mxu0 0
    %515 = vmatprep.subr.bf16.mxu0 0
    %516 = vmatpush2.bf16.msra.mxu0 0
    %517 = vmatprep.subr.bf16.mxu0 0
    %518 = vmatpush2.bf16.msra.mxu0 0
    %519 = vmatprep.subr.bf16.mxu0 0
    %520 = vmatpush2.bf16.msra.mxu0 0
    %521 = vmatprep.subr.bf16.mxu0 0
    %522 = vmatpush2.bf16.msra.mxu0 0
    %523 = vmatprep.subr.bf16.mxu0 0
    %524 = vmatpush2.bf16.msra.mxu0 0
    %525 = vmatprep.mubr.bf16.mxu0 0
    %526 = vmatmul.mubr.bf16.gmra.mxu0 %v310
    %v527 = vpop.f32.mrf.mxu0
    %v528 = vadd.f32 0.0, %v527
    %v529 = vpop.f32.mrf.mxu0
    %v530 = vpop.f32.mrf.mxu0
    %v531 = vadd.f32 0.0, %v530
    %v532 = vpop.f32.mrf.mxu0
    %533 = vmatprep.mubr.bf16.mxu0 0
    %534 = vmatmul.mubr.bf16.gmra.mxu0 %v311
    %v535 = vpop.f32.mrf.mxu0
    %v536 = vadd.f32 0.0, %v535
    %v537 = vpop.f32.mrf.mxu0
    %v538 = vpop.f32.mrf.mxu0
    %v539 = vadd.f32 0.0, %v538
    %v540 = vpop.f32.mrf.mxu0
    %541 = vdwg.mxu0
    %v542 = vpack.c.bf16 %v479, %v475
    %v543 = vpack.c.bf16 %v489, %v485
    %v544 = vpack.c.bf16 %v481, %v477
    %v545 = vpack.c.bf16 %v491, %v487
    %546 = vmatprep.subr.bf16.mxu0 0
    %547 = vmatpush1.bf16.xpose.msra.mxu0 0
    %548 = vmatprep.subr.bf16.mxu0 0
    %549 = vmatpush1.bf16.xpose.msra.mxu0 0
    %550 = vmatprep.subr.bf16.mxu0 0
    %551 = vmatpush1.bf16.xpose.msra.mxu0 0
    %552 = vmatprep.subr.bf16.mxu0 0
    %553 = vmatpush1.bf16.xpose.msra.mxu0 0
    %554 = vmatprep.subr.bf16.mxu0 0
    %555 = vmatpush1.bf16.xpose.msra.mxu0 0
    %556 = vmatprep.subr.bf16.mxu0 0
    %557 = vmatpush1.bf16.xpose.msra.mxu0 0
    %558 = vmatprep.subr.bf16.mxu0 0
    %559 = vmatpush1.bf16.xpose.msra.mxu0 %v545
    %560 = vmatprep.subr.bf16.mxu0 0
    %561 = vmatpush1.bf16.xpose.msra.mxu0 %v544
    %562 = vmatprep.subr.bf16.mxu0 0
    %563 = vmatpush2.bf16.xpose.msra.mxu0 0
    %564 = vmatprep.subr.bf16.mxu0 0
    %565 = vmatpush2.bf16.xpose.msra.mxu0 0
    %566 = vmatprep.subr.bf16.mxu0 0
    %567 = vmatpush2.bf16.xpose.msra.mxu0 0
    %568 = vmatprep.subr.bf16.mxu0 0
    %569 = vmatpush2.bf16.xpose.msra.mxu0 0
    %570 = vmatprep.subr.bf16.mxu0 0
    %571 = vmatpush2.bf16.xpose.msra.mxu0 0
    %572 = vmatprep.subr.bf16.mxu0 0
    %573 = vmatpush2.bf16.xpose.msra.mxu0 0
    %574 = vmatprep.subr.bf16.mxu0 0
    %575 = vmatpush2.bf16.xpose.msra.mxu0 0
    %576 = vmatprep.subr.bf16.mxu0 0
    %577 = vmatpush2.bf16.xpose.msra.mxu0 0
    %578 = vmatprep.mubr.bf16.mxu0 0
    %579 = vmatmul.mubr.bf16.gmra.mxu0 %v542
    %v580 = vpop.f32.mrf.mxu0
    %v581 = vadd.f32 %v213, %v580
    %v582 = vpop.f32.mrf.mxu0
    %v583 = vpop.f32.mrf.mxu0
    %v584 = vadd.f32 %v214, %v583
    %v585 = vpop.f32.mrf.mxu0
    %586 = vmatprep.mubr.bf16.mxu0 0
    %587 = vmatmul.mubr.bf16.gmra.mxu0 %v543
    %v588 = vpop.f32.mrf.mxu0
    %v589 = vadd.f32 %v215, %v588
    %v590 = vpop.f32.mrf.mxu0
    %v591 = vpop.f32.mrf.mxu0
    %v592 = vadd.f32 %v216, %v591
    %v593 = vpop.f32.mrf.mxu0
    %594 = vdwg.mxu0
    %vm595 = vcmask 261120
    %v596 = vsel %vm595, %v581, -inf
    %597 = vmax.xlane.f32.xlu0 %v596
    %v598 = vpop.xlane.xlu0 %597
    %v599 = vsel %vm595, %v584, -inf
    %600 = vmax.xlane.f32.xlu0 %v599
    %v601 = vpop.xlane.xlu0 %600
    %v602 = vsel %vm595, %v589, -inf
    %603 = vmax.xlane.f32.xlu0 %v602
    %v604 = vpop.xlane.xlu0 %603
    %v605 = vsel %vm595, %v592, -inf
    %606 = vmax.xlane.f32.xlu0 %v605
    %v607 = vpop.xlane.xlu0 %606
    %v608 = vsub.f32 %v581, %v598
    %v609 = vsub.f32 %v584, %v601
    %v610 = vsub.f32 %v589, %v604
    %v611 = vsub.f32 %v592, %v607
    %v612 = vmul.f32 %v608, 1.442695
    %v613 = vpow.pop %v612
    %v614 = vmul.f32 %v609, 1.442695
    %v615 = vpow.pop %v614
    %v616 = vmul.f32 %v610, 1.442695
    %v617 = vpow.pop %v616
    %v618 = vmul.f32 %v611, 1.442695
    %v619 = vpow.pop %v618
    %v620 = vsel %vm595, %v613, 0.0
    %621 = vadd.xlane.f32.xlu0 %v620
    %v622 = vpop.xlane.xlu0 %621
    %v623 = vsel %vm595, %v615, 0.0
    %624 = vadd.xlane.f32.xlu0 %v623
    %v625 = vpop.xlane.xlu0 %624
    %v626 = vsel %vm595, %v617, 0.0
    %627 = vadd.xlane.f32.xlu0 %v626
    %v628 = vpop.xlane.xlu0 %627
    %v629 = vsel %vm595, %v619, 0.0
    %630 = vadd.xlane.f32.xlu0 %v629
    %v631 = vpop.xlane.xlu0 %630
    %v632 = vrcp.pop %v622
    %v633 = vrcp.pop %v625
    %v634 = vrcp.pop %v628
    %v635 = vrcp.pop %v631
    %v636 = vmul.f32 %v613, %v632
    %v637 = vmul.f32 %v615, %v633
    %v638 = vmul.f32 %v617, %v634
    %v639 = vmul.f32 %v619, %v635
    %v640 = vpack.c.bf16 %v531, %v528
    %v641 = vpack.c.bf16 %v539, %v536
    %v642 = vpack.c.bf16 %v637, %v636
    %v643 = vpack.c.bf16 %v639, %v638
    %v645 = vsel %vm595, %v642, 0
    %v648 = vsel %vm595, %v643, 0
    %650 = vmatprep.subr.bf16.mxu0 0
    %651 = vmatpush1.bf16.msra.mxu0 0
    %652 = vmatprep.subr.bf16.mxu0 0
    %653 = vmatpush1.bf16.msra.mxu0 0
    %654 = vmatprep.subr.bf16.mxu0 0
    %655 = vmatpush1.bf16.msra.mxu0 0
    %656 = vmatprep.subr.bf16.mxu0 0
    %657 = vmatpush1.bf16.msra.mxu0 0
    %658 = vmatprep.subr.bf16.mxu0 0
    %659 = vmatpush1.bf16.msra.mxu0 0
    %660 = vmatprep.subr.bf16.mxu0 0
    %661 = vmatpush1.bf16.msra.mxu0 0
    %662 = vmatprep.subr.bf16.mxu0 0
    %663 = vmatpush1.bf16.msra.mxu0 %v641
    %664 = vmatprep.subr.bf16.mxu0 0
    %665 = vmatpush1.bf16.msra.mxu0 %v640
    %666 = vmatprep.subr.bf16.mxu0 0
    %667 = vmatpush2.bf16.msra.mxu0 0
    %668 = vmatprep.subr.bf16.mxu0 0
    %669 = vmatpush2.bf16.msra.mxu0 0
    %670 = vmatprep.subr.bf16.mxu0 0
    %671 = vmatpush2.bf16.msra.mxu0 0
    %672 = vmatprep.subr.bf16.mxu0 0
    %673 = vmatpush2.bf16.msra.mxu0 0
    %674 = vmatprep.subr.bf16.mxu0 0
    %675 = vmatpush2.bf16.msra.mxu0 0
    %676 = vmatprep.subr.bf16.mxu0 0
    %677 = vmatpush2.bf16.msra.mxu0 0
    %678 = vmatprep.subr.bf16.mxu0 0
    %679 = vmatpush2.bf16.msra.mxu0 0
    %680 = vmatprep.subr.bf16.mxu0 0
    %681 = vmatpush2.bf16.msra.mxu0 0
    %682 = vmatprep.mubr.bf16.mxu0 0
    %683 = vmatmul.mubr.bf16.gmra.mxu0 %v645
    %v684 = vpop.f32.mrf.mxu0
    %v685 = vadd.f32 0.0, %v684
    %v686 = vpop.f32.mrf.mxu0
    %v687 = vpop.f32.mrf.mxu0
    %v688 = vadd.f32 0.0, %v687
    %v689 = vpop.f32.mrf.mxu0
    %690 = vmatprep.mubr.bf16.mxu0 0
    %691 = vmatmul.mubr.bf16.gmra.mxu0 %v648
    %v692 = vpop.f32.mrf.mxu0
    %v693 = vadd.f32 0.0, %v692
    %v694 = vpop.f32.mrf.mxu0
    %v695 = vpop.f32.mrf.mxu0
    %v696 = vadd.f32 0.0, %v695
    %v697 = vpop.f32.mrf.mxu0
    %698 = vdwg.mxu0
    %v699 = vld [vmem:[%s2 + $0xc] sm:$0xf]
    %v700 = vld [vmem:[%s2 + $0x28] sm:$0xf]
    %v701 = vld [vmem:[%s2 + $0x44] sm:$0xf]
    %v702 = vld [vmem:[%s2 + $0x60] sm:$0xf]
    %v703 = vld [vmem:[%s2 + $0x7c] sm:$0xf]
    %v704 = vld [vmem:[%s2 + $0x98] sm:$0xf]
    %v705 = vld [vmem:[%s2 + $0xb4] sm:$0xf]
    %v706 = vld [vmem:[%s2 + $0xd0] sm:$0xf]
    %v707 = vld [vmem:[%s2 + $0xec] sm:$0xf]
    %v708 = vld [vmem:[%s2 + $0x108] sm:$0xf]
    %v709 = vld [vmem:[%s2 + $0x124] sm:$0xf]
    %v710 = vld [vmem:[%s2 + $0x140] sm:$0xf]
    %v711 = vld [vmem:[%s2 + $0x15c] sm:$0xf]
    %v712 = vld [vmem:[%s2 + $0x178] sm:$0xf]
    %v713 = vld [vmem:[%s2 + $0x194] sm:$0xf]
    %v714 = vld [vmem:[%s2 + $0x1b0] sm:$0xf]
    %v715 = vpack.c.bf16 %v688, %v685
    %v716 = vpack.c.bf16 %v696, %v693
    %v733 = vunpack.c.l.b16 %v699
    %v734 = vunpack.c.l.b16 %v700
    %v735 = vunpack.c.l.b16 %v701
    %v736 = vunpack.c.l.b16 %v702
    %v737 = vunpack.c.l.b16 %v703
    %v738 = vunpack.c.l.b16 %v704
    %v739 = vunpack.c.l.b16 %v705
    %v740 = vunpack.c.l.b16 %v706
    %v741 = vunpack.c.l.b16 %v707
    %v742 = vunpack.c.l.b16 %v708
    %v743 = vunpack.c.l.b16 %v709
    %v744 = vunpack.c.l.b16 %v710
    %v745 = vunpack.c.l.b16 %v711
    %v746 = vunpack.c.l.b16 %v712
    %v747 = vunpack.c.l.b16 %v713
    %v748 = vunpack.c.l.b16 %v714
    %v749 = vpack.c.b16 %v734, %v733
    %v750 = vpack.c.b16 %v736, %v735
    %v751 = vpack.c.b16 %v738, %v737
    %v752 = vpack.c.b16 %v740, %v739
    %v753 = vpack.c.b16 %v742, %v741
    %v754 = vpack.c.b16 %v744, %v743
    %v755 = vpack.c.b16 %v746, %v745
    %v756 = vpack.c.b16 %v748, %v747
    %765 = vmatprep.subr.bf16.mxu0 0
    %766 = vmatpush1.bf16.msra.mxu0 %v756
    %767 = vmatprep.subr.bf16.mxu0 0
    %768 = vmatpush1.bf16.msra.mxu0 %v755
    %769 = vmatprep.subr.bf16.mxu0 0
    %770 = vmatpush1.bf16.msra.mxu0 %v754
    %771 = vmatprep.subr.bf16.mxu0 0
    %772 = vmatpush1.bf16.msra.mxu0 %v753
    %773 = vmatprep.subr.bf16.mxu0 0
    %774 = vmatpush1.bf16.msra.mxu0 %v752
    %775 = vmatprep.subr.bf16.mxu0 0
    %776 = vmatpush1.bf16.msra.mxu0 %v751
    %777 = vmatprep.subr.bf16.mxu0 0
    %778 = vmatpush1.bf16.msra.mxu0 %v750
    %779 = vmatprep.subr.bf16.mxu0 0
    %780 = vmatpush1.bf16.msra.mxu0 %v749
    %781 = vmatprep.subr.bf16.mxu0 0
    %782 = vmatpush2.bf16.msra.mxu0 0
    %783 = vmatprep.subr.bf16.mxu0 0
    %784 = vmatpush2.bf16.msra.mxu0 0
    %785 = vmatprep.subr.bf16.mxu0 0
    %786 = vmatpush2.bf16.msra.mxu0 0
    %787 = vmatprep.subr.bf16.mxu0 0
    %788 = vmatpush2.bf16.msra.mxu0 0
    %789 = vmatprep.subr.bf16.mxu0 0
    %790 = vmatpush2.bf16.msra.mxu0 0
    %791 = vmatprep.subr.bf16.mxu0 0
    %792 = vmatpush2.bf16.msra.mxu0 0
    %793 = vmatprep.subr.bf16.mxu0 0
    %794 = vmatpush2.bf16.msra.mxu0 0
    %795 = vmatprep.subr.bf16.mxu0 0
    %796 = vmatpush2.bf16.msra.mxu0 0
    %797 = vmatprep.mubr.bf16.mxu0 0
    %798 = vmatmul.mubr.bf16.gmra.mxu0 %v715
    %v799 = vpop.f32.mrf.mxu0
    %v800 = vadd.f32 0.0, %v799
    %v801 = vpop.f32.mrf.mxu0
    %v802 = vpop.f32.mrf.mxu0
    %v803 = vadd.f32 0.0, %v802
    %v804 = vpop.f32.mrf.mxu0
    %805 = vmatprep.mubr.bf16.mxu0 0
    %806 = vmatmul.mubr.bf16.gmra.mxu0 %v716
    %v807 = vpop.f32.mrf.mxu0
    %v808 = vadd.f32 0.0, %v807
    %v809 = vpop.f32.mrf.mxu0
    %v810 = vpop.f32.mrf.mxu0
    %v811 = vadd.f32 0.0, %v810
    %v812 = vpop.f32.mrf.mxu0
    %813 = vdwg.mxu0
    %v814 = vadd.f32 %v163, %v800
    %v815 = vadd.f32 %v166, %v803
    %v816 = vadd.f32 %v171, %v808
    %v817 = vadd.f32 %v174, %v811
    %818 = vadd.xlane.f32.xlu0 %v814
    %v819 = vpop.xlane.xlu0 %818
    %820 = vadd.xlane.f32.xlu0 %v815
    %v821 = vpop.xlane.xlu0 %820
    %822 = vadd.xlane.f32.xlu0 %v816
    %v823 = vpop.xlane.xlu0 %822
    %824 = vadd.xlane.f32.xlu0 %v817
    %v825 = vpop.xlane.xlu0 %824
    %v826 = vmul.f32 %v819, %v225
    %v827 = vmul.f32 %v821, %v225
    %v828 = vmul.f32 %v823, %v225
    %v829 = vmul.f32 %v825, %v225
    %v830 = vsub.f32 %v814, %v826
    %v831 = vsub.f32 %v815, %v827
    %v832 = vsub.f32 %v816, %v828
    %v833 = vsub.f32 %v817, %v829
    %v834 = vmul.f32 %v830, %v830
    %v835 = vmul.f32 %v831, %v831
    %v836 = vmul.f32 %v832, %v832
    %v837 = vmul.f32 %v833, %v833
    %838 = vadd.xlane.f32.xlu0 %v834
    %v839 = vpop.xlane.xlu0 %838
    %840 = vadd.xlane.f32.xlu0 %v835
    %v841 = vpop.xlane.xlu0 %840
    %842 = vadd.xlane.f32.xlu0 %v836
    %v843 = vpop.xlane.xlu0 %842
    %844 = vadd.xlane.f32.xlu0 %v837
    %v845 = vpop.xlane.xlu0 %844
    %v846 = vmul.f32 %v839, %v225
    %v847 = vmul.f32 %v841, %v225
    %v848 = vmul.f32 %v843, %v225
    %v849 = vmul.f32 %v845, %v225
    %v850 = vadd.f32 %v846, 1e-05
    %v851 = vadd.f32 %v847, 1e-05
    %v852 = vadd.f32 %v848, 1e-05
    %v853 = vadd.f32 %v849, 1e-05
    %v854 = vrsqrt.pop %v850
    %v855 = vrsqrt.pop %v851
    %v856 = vrsqrt.pop %v852
    %v857 = vrsqrt.pop %v853
    %v858 = vmul.f32 %v830, %v854
    %v859 = vmul.f32 %v831, %v855
    %v860 = vmul.f32 %v832, %v856
    %v861 = vmul.f32 %v833, %v857
    %v862 = vlaneseq
    %v863 = vshrl.u32 %v862, 7
    %v864 = vsub.s32 1, %v863
    %v865 = vrot.slane %v34, %v864
    %v866 = vmul.f32 %v858, %v865
    %v867 = vmul.f32 %v859, %v865
    %v868 = vmul.f32 %v860, %v865
    %v869 = vmul.f32 %v861, %v865
    %v870 = vlaneseq
    %v871 = vshrl.u32 %v870, 7
    %v872 = vsub.s32 1, %v871
    %v873 = vrot.slane %v35, %v872
    %v874 = vadd.f32 %v866, %v873
    %v875 = vadd.f32 %v867, %v873
    %v876 = vadd.f32 %v868, %v873
    %v877 = vadd.f32 %v869, %v873
    %v878 = vld [vmem:[%s2 + $0x10] sm:$0xff]
    %v879 = vld [vmem:[%s2 + $0x2c] sm:$0xff]
    %v880 = vld [vmem:[%s2 + $0x48] sm:$0xff]
    %v881 = vld [vmem:[%s2 + $0x64] sm:$0xff]
    %v882 = vld [vmem:[%s2 + $0x80] sm:$0xff]
    %v883 = vld [vmem:[%s2 + $0x9c] sm:$0xff]
    %v884 = vld [vmem:[%s2 + $0xb8] sm:$0xff]
    %v885 = vld [vmem:[%s2 + $0xd4] sm:$0xff]
    %v886 = vld [vmem:[%s2 + $0xf0] sm:$0xff]
    %v887 = vld [vmem:[%s2 + $0x10c] sm:$0xff]
    %v888 = vld [vmem:[%s2 + $0x128] sm:$0xff]
    %v889 = vld [vmem:[%s2 + $0x144] sm:$0xff]
    %v890 = vld [vmem:[%s2 + $0x160] sm:$0xff]
    %v891 = vld [vmem:[%s2 + $0x17c] sm:$0xff]
    %v892 = vld [vmem:[%s2 + $0x198] sm:$0xff]
    %v893 = vld [vmem:[%s2 + $0x1b4] sm:$0xff]
    %v894 = vpack.c.bf16 %v875, %v874
    %v895 = vpack.c.bf16 %v877, %v876
    %v896 = vlaneseq
    %v897 = vshrl.u32 %v896, 7
    %v898 = vsub.s32 3, %v897
    %v899 = vrot.slane %v34, %v898
    %v900 = vlaneseq
    %v901 = vshrl.u32 %v900, 7
    %v902 = vsub.s32 3, %v901
    %v903 = vrot.slane %v35, %v902
    %v920 = vunpack.c.l.b16 %v878
    %v921 = vunpack.c.h.b16 %v878
    %v922 = vunpack.c.l.b16 %v879
    %v923 = vunpack.c.h.b16 %v879
    %v924 = vunpack.c.l.b16 %v880
    %v925 = vunpack.c.h.b16 %v880
    %v926 = vunpack.c.l.b16 %v881
    %v927 = vunpack.c.h.b16 %v881
    %v928 = vunpack.c.l.b16 %v882
    %v929 = vunpack.c.h.b16 %v882
    %v930 = vunpack.c.l.b16 %v883
    %v931 = vunpack.c.h.b16 %v883
    %v932 = vunpack.c.l.b16 %v884
    %v933 = vunpack.c.h.b16 %v884
    %v934 = vunpack.c.l.b16 %v885
    %v935 = vunpack.c.h.b16 %v885
    %v936 = vunpack.c.l.b16 %v886
    %v937 = vunpack.c.h.b16 %v886
    %v938 = vunpack.c.l.b16 %v887
    %v939 = vunpack.c.h.b16 %v887
    %v940 = vunpack.c.l.b16 %v888
    %v941 = vunpack.c.h.b16 %v888
    %v942 = vunpack.c.l.b16 %v889
    %v943 = vunpack.c.h.b16 %v889
    %v944 = vunpack.c.l.b16 %v890
    %v945 = vunpack.c.h.b16 %v890
    %v946 = vunpack.c.l.b16 %v891
    %v947 = vunpack.c.h.b16 %v891
    %v948 = vunpack.c.l.b16 %v892
    %v949 = vunpack.c.h.b16 %v892
    %v950 = vunpack.c.l.b16 %v893
    %v951 = vunpack.c.h.b16 %v893
    %v952 = vpack.c.b16 %v922, %v920
    %v953 = vpack.c.b16 %v923, %v921
    %v954 = vpack.c.b16 %v926, %v924
    %v955 = vpack.c.b16 %v927, %v925
    %v956 = vpack.c.b16 %v930, %v928
    %v957 = vpack.c.b16 %v931, %v929
    %v958 = vpack.c.b16 %v934, %v932
    %v959 = vpack.c.b16 %v935, %v933
    %v960 = vpack.c.b16 %v938, %v936
    %v961 = vpack.c.b16 %v939, %v937
    %v962 = vpack.c.b16 %v942, %v940
    %v963 = vpack.c.b16 %v943, %v941
    %v964 = vpack.c.b16 %v946, %v944
    %v965 = vpack.c.b16 %v947, %v945
    %v966 = vpack.c.b16 %v950, %v948
    %v967 = vpack.c.b16 %v951, %v949
    %984 = vmatprep.subr.bf16.mxu0 %v967
    %985 = vmatpush1.bf16.msra.mxu0 %v966
    %986 = vmatprep.subr.bf16.mxu0 %v965
    %987 = vmatpush1.bf16.msra.mxu0 %v964
    %988 = vmatprep.subr.bf16.mxu0 %v963
    %989 = vmatpush1.bf16.msra.mxu0 %v962
    %990 = vmatprep.subr.bf16.mxu0 %v961
    %991 = vmatpush1.bf16.msra.mxu0 %v960
    %992 = vmatprep.subr.bf16.mxu0 %v959
    %993 = vmatpush1.bf16.msra.mxu0 %v958
    %994 = vmatprep.subr.bf16.mxu0 %v957
    %995 = vmatpush1.bf16.msra.mxu0 %v956
    %996 = vmatprep.subr.bf16.mxu0 %v955
    %997 = vmatpush1.bf16.msra.mxu0 %v954
    %998 = vmatprep.subr.bf16.mxu0 %v953
    %999 = vmatpush1.bf16.msra.mxu0 %v952
    %1000 = vmatprep.subr.bf16.mxu0 0
    %1001 = vmatpush2.bf16.msra.mxu0 0
    %1002 = vmatprep.subr.bf16.mxu0 0
    %1003 = vmatpush2.bf16.msra.mxu0 0
    %1004 = vmatprep.subr.bf16.mxu0 0
    %1005 = vmatpush2.bf16.msra.mxu0 0
    %1006 = vmatprep.subr.bf16.mxu0 0
    %1007 = vmatpush2.bf16.msra.mxu0 0
    %1008 = vmatprep.subr.bf16.mxu0 0
    %1009 = vmatpush2.bf16.msra.mxu0 0
    %1010 = vmatprep.subr.bf16.mxu0 0
    %1011 = vmatpush2.bf16.msra.mxu0 0
    %1012 = vmatprep.subr.bf16.mxu0 0
    %1013 = vmatpush2.bf16.msra.mxu0 0
    %1014 = vmatprep.subr.bf16.mxu0 0
    %1015 = vmatpush2.bf16.msra.mxu0 0
    %1016 = vmatprep.mubr.bf16.mxu0 0
    %1017 = vmatmul.mubr.bf16.gmra.mxu0 %v894
    %v1018 = vpop.f32.mrf.mxu0
    %v1019 = vadd.f32 %v899, %v1018
    %v1020 = vpop.f32.mrf.mxu0
    %v1021 = vadd.f32 %v903, %v1020
    %v1022 = vpop.f32.mrf.mxu0
    %v1023 = vadd.f32 %v899, %v1022
    %v1024 = vpop.f32.mrf.mxu0
    %v1025 = vadd.f32 %v903, %v1024
    %1026 = vmatprep.mubr.bf16.mxu0 0
    %1027 = vmatmul.mubr.bf16.gmra.mxu0 %v895
    %v1028 = vpop.f32.mrf.mxu0
    %v1029 = vadd.f32 %v899, %v1028
    %v1030 = vpop.f32.mrf.mxu0
    %v1031 = vadd.f32 %v903, %v1030
    %v1032 = vpop.f32.mrf.mxu0
    %v1033 = vadd.f32 %v899, %v1032
    %v1034 = vpop.f32.mrf.mxu0
    %v1035 = vadd.f32 %v903, %v1034
    %1036 = vdwg.mxu0
    %v1037 = vmul.f32 %v1019, 0.5
    %v1038 = vmul.f32 %v1021, 0.5
    %v1039 = vmul.f32 %v1023, 0.5
    %v1040 = vmul.f32 %v1025, 0.5
    %v1041 = vmul.f32 %v1029, 0.5
    %v1042 = vmul.f32 %v1031, 0.5
    %v1043 = vmul.f32 %v1033, 0.5
    %v1044 = vmul.f32 %v1035, 0.5
    %v1045 = vmul.f32 %v1019, 0.044715
    %v1046 = vmul.f32 %v1021, 0.044715
    %v1047 = vmul.f32 %v1023, 0.044715
    %v1048 = vmul.f32 %v1025, 0.044715
    %v1049 = vmul.f32 %v1029, 0.044715
    %v1050 = vmul.f32 %v1031, 0.044715
    %v1051 = vmul.f32 %v1033, 0.044715
    %v1052 = vmul.f32 %v1035, 0.044715
    %v1053 = vmul.f32 %v1045, %v1019
    %v1054 = vmul.f32 %v1046, %v1021
    %v1055 = vmul.f32 %v1047, %v1023
    %v1056 = vmul.f32 %v1048, %v1025
    %v1057 = vmul.f32 %v1049, %v1029
    %v1058 = vmul.f32 %v1050, %v1031
    %v1059 = vmul.f32 %v1051, %v1033
    %v1060 = vmul.f32 %v1052, %v1035
    %v1061 = vmul.f32 %v1053, %v1019
    %v1062 = vmul.f32 %v1054, %v1021
    %v1063 = vmul.f32 %v1055, %v1023
    %v1064 = vmul.f32 %v1056, %v1025
    %v1065 = vmul.f32 %v1057, %v1029
    %v1066 = vmul.f32 %v1058, %v1031
    %v1067 = vmul.f32 %v1059, %v1033
    %v1068 = vmul.f32 %v1060, %v1035
    %v1069 = vadd.f32 %v1019, %v1061
    %v1070 = vadd.f32 %v1021, %v1062
    %v1071 = vadd.f32 %v1023, %v1063
    %v1072 = vadd.f32 %v1025, %v1064
    %v1073 = vadd.f32 %v1029, %v1065
    %v1074 = vadd.f32 %v1031, %v1066
    %v1075 = vadd.f32 %v1033, %v1067
    %v1076 = vadd.f32 %v1035, %v1068
    %v1077 = vmul.f32 %v1069, 0.7978846
    %v1078 = vmul.f32 %v1070, 0.7978846
    %v1079 = vmul.f32 %v1071, 0.7978846
    %v1080 = vmul.f32 %v1072, 0.7978846
    %v1081 = vmul.f32 %v1073, 0.7978846
    %v1082 = vmul.f32 %v1074, 0.7978846
    %v1083 = vmul.f32 %v1075, 0.7978846
    %v1084 = vmul.f32 %v1076, 0.7978846
    %v1085 = vtanh.pop %v1077
    %v1086 = vtanh.pop %v1078
    %v1087 = vtanh.pop %v1079
    %v1088 = vtanh.pop %v1080
    %v1089 = vtanh.pop %v1081
    %v1090 = vtanh.pop %v1082
    %v1091 = vtanh.pop %v1083
    %v1092 = vtanh.pop %v1084
    %v1093 = vadd.f32 %v1085, 1.0
    %v1094 = vadd.f32 %v1086, 1.0
    %v1095 = vadd.f32 %v1087, 1.0
    %v1096 = vadd.f32 %v1088, 1.0
    %v1097 = vadd.f32 %v1089, 1.0
    %v1098 = vadd.f32 %v1090, 1.0
    %v1099 = vadd.f32 %v1091, 1.0
    %v1100 = vadd.f32 %v1092, 1.0
    %v1101 = vmul.f32 %v1037, %v1093
    %v1102 = vmul.f32 %v1038, %v1094
    %v1103 = vmul.f32 %v1039, %v1095
    %v1104 = vmul.f32 %v1040, %v1096
    %v1105 = vmul.f32 %v1041, %v1097
    %v1106 = vmul.f32 %v1042, %v1098
    %v1107 = vmul.f32 %v1043, %v1099
    %v1108 = vmul.f32 %v1044, %v1100
    %v1109 = vld [vmem:[%s4] sm:$0xf]
    %v1110 = vld [vmem:[%s4 + $0x4] sm:$0xf]
    %v1111 = vld [vmem:[%s4 + $0x8] sm:$0xf]
    %v1112 = vld [vmem:[%s4 + $0xc] sm:$0xf]
    %v1113 = vld [vmem:[%s4 + $0x10] sm:$0xf]
    %v1114 = vld [vmem:[%s4 + $0x14] sm:$0xf]
    %v1115 = vld [vmem:[%s4 + $0x18] sm:$0xf]
    %v1116 = vld [vmem:[%s4 + $0x1c] sm:$0xf]
    %v1117 = vld [vmem:[%s4 + $0x20] sm:$0xf]
    %v1118 = vld [vmem:[%s4 + $0x24] sm:$0xf]
    %v1119 = vld [vmem:[%s4 + $0x28] sm:$0xf]
    %v1120 = vld [vmem:[%s4 + $0x2c] sm:$0xf]
    %v1121 = vld [vmem:[%s4 + $0x30] sm:$0xf]
    %v1122 = vld [vmem:[%s4 + $0x34] sm:$0xf]
    %v1123 = vld [vmem:[%s4 + $0x38] sm:$0xf]
    %v1124 = vld [vmem:[%s4 + $0x3c] sm:$0xf]
    %v1125 = vld [vmem:[%s4 + $0x40] sm:$0xf]
    %v1126 = vld [vmem:[%s4 + $0x44] sm:$0xf]
    %v1127 = vld [vmem:[%s4 + $0x48] sm:$0xf]
    %v1128 = vld [vmem:[%s4 + $0x4c] sm:$0xf]
    %v1129 = vld [vmem:[%s4 + $0x50] sm:$0xf]
    %v1130 = vld [vmem:[%s4 + $0x54] sm:$0xf]
    %v1131 = vld [vmem:[%s4 + $0x58] sm:$0xf]
    %v1132 = vld [vmem:[%s4 + $0x5c] sm:$0xf]
    %v1133 = vld [vmem:[%s4 + $0x60] sm:$0xf]
    %v1134 = vld [vmem:[%s4 + $0x64] sm:$0xf]
    %v1135 = vld [vmem:[%s4 + $0x68] sm:$0xf]
    %v1136 = vld [vmem:[%s4 + $0x6c] sm:$0xf]
    %v1137 = vld [vmem:[%s4 + $0x70] sm:$0xf]
    %v1138 = vld [vmem:[%s4 + $0x74] sm:$0xf]
    %v1139 = vld [vmem:[%s4 + $0x78] sm:$0xf]
    %v1140 = vld [vmem:[%s4 + $0x7c] sm:$0xf]
    %v1141 = vpack.c.bf16 %v1103, %v1101
    %v1142 = vpack.c.bf16 %v1104, %v1102
    %v1143 = vpack.c.bf16 %v1107, %v1105
    %v1144 = vpack.c.bf16 %v1108, %v1106
    %v1177 = vunpack.c.l.b16 %v1109
    %v1178 = vunpack.c.l.b16 %v1110
    %v1179 = vunpack.c.l.b16 %v1111
    %v1180 = vunpack.c.l.b16 %v1112
    %v1181 = vunpack.c.l.b16 %v1113
    %v1182 = vunpack.c.l.b16 %v1114
    %v1183 = vunpack.c.l.b16 %v1115
    %v1184 = vunpack.c.l.b16 %v1116
    %v1185 = vunpack.c.l.b16 %v1117
    %v1186 = vunpack.c.l.b16 %v1118
    %v1187 = vunpack.c.l.b16 %v1119
    %v1188 = vunpack.c.l.b16 %v1120
    %v1189 = vunpack.c.l.b16 %v1121
    %v1190 = vunpack.c.l.b16 %v1122
    %v1191 = vunpack.c.l.b16 %v1123
    %v1192 = vunpack.c.l.b16 %v1124
    %v1193 = vunpack.c.l.b16 %v1125
    %v1194 = vunpack.c.l.b16 %v1126
    %v1195 = vunpack.c.l.b16 %v1127
    %v1196 = vunpack.c.l.b16 %v1128
    %v1197 = vunpack.c.l.b16 %v1129
    %v1198 = vunpack.c.l.b16 %v1130
    %v1199 = vunpack.c.l.b16 %v1131
    %v1200 = vunpack.c.l.b16 %v1132
    %v1201 = vunpack.c.l.b16 %v1133
    %v1202 = vunpack.c.l.b16 %v1134
    %v1203 = vunpack.c.l.b16 %v1135
    %v1204 = vunpack.c.l.b16 %v1136
    %v1205 = vunpack.c.l.b16 %v1137
    %v1206 = vunpack.c.l.b16 %v1138
    %v1207 = vunpack.c.l.b16 %v1139
    %v1208 = vunpack.c.l.b16 %v1140
    %v1209 = vpack.c.b16 %v1178, %v1177
    %v1210 = vpack.c.b16 %v1180, %v1179
    %v1211 = vpack.c.b16 %v1182, %v1181
    %v1212 = vpack.c.b16 %v1184, %v1183
    %v1213 = vpack.c.b16 %v1186, %v1185
    %v1214 = vpack.c.b16 %v1188, %v1187
    %v1215 = vpack.c.b16 %v1190, %v1189
    %v1216 = vpack.c.b16 %v1192, %v1191
    %v1217 = vpack.c.b16 %v1194, %v1193
    %v1218 = vpack.c.b16 %v1196, %v1195
    %v1219 = vpack.c.b16 %v1198, %v1197
    %v1220 = vpack.c.b16 %v1200, %v1199
    %v1221 = vpack.c.b16 %v1202, %v1201
    %v1222 = vpack.c.b16 %v1204, %v1203
    %v1223 = vpack.c.b16 %v1206, %v1205
    %v1224 = vpack.c.b16 %v1208, %v1207
    %1241 = vmatprep.subr.bf16.mxu0 0
    %1242 = vmatpush1.bf16.msra.mxu0 %v1216
    %1243 = vmatprep.subr.bf16.mxu0 0
    %1244 = vmatpush1.bf16.msra.mxu0 %v1215
    %1245 = vmatprep.subr.bf16.mxu0 0
    %1246 = vmatpush1.bf16.msra.mxu0 %v1214
    %1247 = vmatprep.subr.bf16.mxu0 0
    %1248 = vmatpush1.bf16.msra.mxu0 %v1213
    %1249 = vmatprep.subr.bf16.mxu0 0
    %1250 = vmatpush1.bf16.msra.mxu0 %v1212
    %1251 = vmatprep.subr.bf16.mxu0 0
    %1252 = vmatpush1.bf16.msra.mxu0 %v1211
    %1253 = vmatprep.subr.bf16.mxu0 0
    %1254 = vmatpush1.bf16.msra.mxu0 %v1210
    %1255 = vmatprep.subr.bf16.mxu0 0
    %1256 = vmatpush1.bf16.msra.mxu0 %v1209
    %1257 = vmatprep.subr.bf16.mxu0 0
    %1258 = vmatpush2.bf16.msra.mxu0 %v1224
    %1259 = vmatprep.subr.bf16.mxu0 0
    %1260 = vmatpush2.bf16.msra.mxu0 %v1223
    %1261 = vmatprep.subr.bf16.mxu0 0
    %1262 = vmatpush2.bf16.msra.mxu0 %v1222
    %1263 = vmatprep.subr.bf16.mxu0 0
    %1264 = vmatpush2.bf16.msra.mxu0 %v1221
    %1265 = vmatprep.subr.bf16.mxu0 0
    %1266 = vmatpush2.bf16.msra.mxu0 %v1220
    %1267 = vmatprep.subr.bf16.mxu0 0
    %1268 = vmatpush2.bf16.msra.mxu0 %v1219
    %1269 = vmatprep.subr.bf16.mxu0 0
    %1270 = vmatpush2.bf16.msra.mxu0 %v1218
    %1271 = vmatprep.subr.bf16.mxu0 0
    %1272 = vmatpush2.bf16.msra.mxu0 %v1217
    %1273 = vmatprep.mubr.bf16.mxu0 %v1142
    %1274 = vmatmul.mubr.bf16.gmra.mxu0 %v1141
    %v1275 = vpop.f32.mrf.mxu0
    %v1276 = vadd.f32 0.0, %v1275
    %v1277 = vpop.f32.mrf.mxu0
    %v1278 = vpop.f32.mrf.mxu0
    %v1279 = vadd.f32 0.0, %v1278
    %v1280 = vpop.f32.mrf.mxu0
    %1281 = vmatprep.mubr.bf16.mxu0 %v1144
    %1282 = vmatmul.mubr.bf16.gmra.mxu0 %v1143
    %v1283 = vpop.f32.mrf.mxu0
    %v1284 = vadd.f32 0.0, %v1283
    %v1285 = vpop.f32.mrf.mxu0
    %v1286 = vpop.f32.mrf.mxu0
    %v1287 = vadd.f32 0.0, %v1286
    %v1288 = vpop.f32.mrf.mxu0
    %1289 = vdwg.mxu0
    %v1290 = vadd.f32 %v814, %v1276
    %v1291 = vadd.f32 %v815, %v1279
    %v1292 = vadd.f32 %v816, %v1284
    %v1293 = vadd.f32 %v817, %v1287
    %v1294 = vlaneseq
    %v1295 = vshrl.u32 %v1294, 7
    %v1296 = vsub.s32 4, %v1295
    %v1297 = vrot.slane %v34, %v1296
    %v1298 = vadd.f32 %v1290, %v1297
    %v1299 = vadd.f32 %v1291, %v1297
    %v1300 = vadd.f32 %v1292, %v1297
    %v1301 = vadd.f32 %v1293, %v1297
    %1302 = vadd.xlane.f32.xlu0 %v1298
    %v1303 = vpop.xlane.xlu0 %1302
    %1304 = vadd.xlane.f32.xlu0 %v1299
    %v1305 = vpop.xlane.xlu0 %1304
    %1306 = vadd.xlane.f32.xlu0 %v1300
    %v1307 = vpop.xlane.xlu0 %1306
    %1308 = vadd.xlane.f32.xlu0 %v1301
    %v1309 = vpop.xlane.xlu0 %1308
    %v1310 = vmul.f32 %v1303, %v225
    %v1311 = vmul.f32 %v1305, %v225
    %v1312 = vmul.f32 %v1307, %v225
    %v1313 = vmul.f32 %v1309, %v225
    %v1314 = vsub.f32 %v1298, %v1310
    %v1315 = vsub.f32 %v1299, %v1311
    %v1316 = vsub.f32 %v1300, %v1312
    %v1317 = vsub.f32 %v1301, %v1313
    %v1318 = vmul.f32 %v1314, %v1314
    %v1319 = vmul.f32 %v1315, %v1315
    %v1320 = vmul.f32 %v1316, %v1316
    %v1321 = vmul.f32 %v1317, %v1317
    %1322 = vadd.xlane.f32.xlu0 %v1318
    %v1323 = vpop.xlane.xlu0 %1322
    %1324 = vadd.xlane.f32.xlu0 %v1319
    %v1325 = vpop.xlane.xlu0 %1324
    %1326 = vadd.xlane.f32.xlu0 %v1320
    %v1327 = vpop.xlane.xlu0 %1326
    %1328 = vadd.xlane.f32.xlu0 %v1321
    %v1329 = vpop.xlane.xlu0 %1328
    %v1330 = vmul.f32 %v1323, %v225
    %v1331 = vmul.f32 %v1325, %v225
    %v1332 = vmul.f32 %v1327, %v225
    %v1333 = vmul.f32 %v1329, %v225
    %v1334 = vadd.f32 %v1330, 1e-05
    %v1335 = vadd.f32 %v1331, 1e-05
    %v1336 = vadd.f32 %v1332, 1e-05
    %v1337 = vadd.f32 %v1333, 1e-05
    %v1338 = vrsqrt.pop %v1334
    %v1339 = vrsqrt.pop %v1335
    %v1340 = vrsqrt.pop %v1336
    %v1341 = vrsqrt.pop %v1337
    %v1342 = vmul.f32 %v1314, %v1338
    %v1343 = vmul.f32 %v1315, %v1339
    %v1344 = vmul.f32 %v1316, %v1340
    %v1345 = vmul.f32 %v1317, %v1341
    %v1346 = vlaneseq
    %v1347 = vshrl.u32 %v1346, 7
    %v1348 = vsub.s32 2, %v1347
    %v1349 = vrot.slane %v34, %v1348
    %v1350 = vmul.f32 %v1342, %v1349
    %v1351 = vmul.f32 %v1343, %v1349
    %v1352 = vmul.f32 %v1344, %v1349
    %v1353 = vmul.f32 %v1345, %v1349
    %v1354 = vlaneseq
    %v1355 = vshrl.u32 %v1354, 7
    %v1356 = vsub.s32 2, %v1355
    %v1357 = vrot.slane %v35, %v1356
    %v1358 = vadd.f32 %v1350, %v1357
    %v1359 = vadd.f32 %v1351, %v1357
    %v1360 = vadd.f32 %v1352, %v1357
    %v1361 = vadd.f32 %v1353, %v1357
    %v1362 = vld [vmem:[%s2 + $0x18] sm:$0xf]
    %v1363 = vld [vmem:[%s2 + $0x34] sm:$0xf]
    %v1364 = vld [vmem:[%s2 + $0x50] sm:$0xf]
    %v1365 = vld [vmem:[%s2 + $0x6c] sm:$0xf]
    %v1366 = vld [vmem:[%s2 + $0x88] sm:$0xf]
    %v1367 = vld [vmem:[%s2 + $0xa4] sm:$0xf]
    %v1368 = vld [vmem:[%s2 + $0xc0] sm:$0xf]
    %v1369 = vld [vmem:[%s2 + $0xdc] sm:$0xf]
    %v1370 = vld [vmem:[%s2 + $0xf8] sm:$0xf]
    %v1371 = vld [vmem:[%s2 + $0x114] sm:$0xf]
    %v1372 = vld [vmem:[%s2 + $0x130] sm:$0xf]
    %v1373 = vld [vmem:[%s2 + $0x14c] sm:$0xf]
    %v1374 = vld [vmem:[%s2 + $0x168] sm:$0xf]
    %v1375 = vld [vmem:[%s2 + $0x184] sm:$0xf]
    %v1376 = vld [vmem:[%s2 + $0x1a0] sm:$0xf]
    %v1377 = vld [vmem:[%s2 + $0x1bc] sm:$0xf]
    %v1378 = vpack.c.bf16 %v1359, %v1358
    %v1379 = vpack.c.bf16 %v1361, %v1360
    %v1380 = vlaneseq
    %v1381 = vshrl.u32 %v1380, 7
    %v1382 = vsub.s32 4, %v1381
    %v1383 = vrot.slane %v35, %v1382
    %v1400 = vunpack.c.l.b16 %v1362
    %v1401 = vunpack.c.l.b16 %v1363
    %v1402 = vunpack.c.l.b16 %v1364
    %v1403 = vunpack.c.l.b16 %v1365
    %v1404 = vunpack.c.l.b16 %v1366
    %v1405 = vunpack.c.l.b16 %v1367
    %v1406 = vunpack.c.l.b16 %v1368
    %v1407 = vunpack.c.l.b16 %v1369
    %v1408 = vunpack.c.l.b16 %v1370
    %v1409 = vunpack.c.l.b16 %v1371
    %v1410 = vunpack.c.l.b16 %v1372
    %v1411 = vunpack.c.l.b16 %v1373
    %v1412 = vunpack.c.l.b16 %v1374
    %v1413 = vunpack.c.l.b16 %v1375
    %v1414 = vunpack.c.l.b16 %v1376
    %v1415 = vunpack.c.l.b16 %v1377
    %v1416 = vpack.c.b16 %v1401, %v1400
    %v1417 = vpack.c.b16 %v1403, %v1402
    %v1418 = vpack.c.b16 %v1405, %v1404
    %v1419 = vpack.c.b16 %v1407, %v1406
    %v1420 = vpack.c.b16 %v1409, %v1408
    %v1421 = vpack.c.b16 %v1411, %v1410
    %v1422 = vpack.c.b16 %v1413, %v1412
    %v1423 = vpack.c.b16 %v1415, %v1414
    %1432 = vmatprep.subr.bf16.mxu0 0
    %1433 = vmatpush1.bf16.msra.mxu0 %v1423
    %1434 = vmatprep.subr.bf16.mxu0 0
    %1435 = vmatpush1.bf16.msra.mxu0 %v1422
    %1436 = vmatprep.subr.bf16.mxu0 0
    %1437 = vmatpush1.bf16.msra.mxu0 %v1421
    %1438 = vmatprep.subr.bf16.mxu0 0
    %1439 = vmatpush1.bf16.msra.mxu0 %v1420
    %1440 = vmatprep.subr.bf16.mxu0 0
    %1441 = vmatpush1.bf16.msra.mxu0 %v1419
    %1442 = vmatprep.subr.bf16.mxu0 0
    %1443 = vmatpush1.bf16.msra.mxu0 %v1418
    %1444 = vmatprep.subr.bf16.mxu0 0
    %1445 = vmatpush1.bf16.msra.mxu0 %v1417
    %1446 = vmatprep.subr.bf16.mxu0 0
    %1447 = vmatpush1.bf16.msra.mxu0 %v1416
    %1448 = vmatprep.subr.bf16.mxu0 0
    %1449 = vmatpush2.bf16.msra.mxu0 0
    %1450 = vmatprep.subr.bf16.mxu0 0
    %1451 = vmatpush2.bf16.msra.mxu0 0
    %1452 = vmatprep.subr.bf16.mxu0 0
    %1453 = vmatpush2.bf16.msra.mxu0 0
    %1454 = vmatprep.subr.bf16.mxu0 0
    %1455 = vmatpush2.bf16.msra.mxu0 0
    %1456 = vmatprep.subr.bf16.mxu0 0
    %1457 = vmatpush2.bf16.msra.mxu0 0
    %1458 = vmatprep.subr.bf16.mxu0 0
    %1459 = vmatpush2.bf16.msra.mxu0 0
    %1460 = vmatprep.subr.bf16.mxu0 0
    %1461 = vmatpush2.bf16.msra.mxu0 0
    %1462 = vmatprep.subr.bf16.mxu0 0
    %1463 = vmatpush2.bf16.msra.mxu0 0
    %1464 = vmatprep.mubr.bf16.mxu0 0
    %1465 = vmatmul.mubr.bf16.gmra.mxu0 %v1378
    %v1466 = vpop.f32.mrf.mxu0
    %v1467 = vadd.f32 %v1383, %v1466
    %v1468 = vpop.f32.mrf.mxu0
    %v1469 = vpop.f32.mrf.mxu0
    %v1470 = vadd.f32 %v1383, %v1469
    %v1471 = vpop.f32.mrf.mxu0
    %1472 = vmatprep.mubr.bf16.mxu0 0
    %1473 = vmatmul.mubr.bf16.gmra.mxu0 %v1379
    %v1474 = vpop.f32.mrf.mxu0
    %v1475 = vadd.f32 %v1383, %v1474
    %v1476 = vpop.f32.mrf.mxu0
    %v1477 = vpop.f32.mrf.mxu0
    %v1478 = vadd.f32 %v1383, %v1477
    %v1479 = vpop.f32.mrf.mxu0
    %1480 = vdwg.mxu0
    %vm1481 = vcmp.lt.s32.totalorder %v37, 32
    %v1482 = vsel %vm1481, %v1467, -1e+09
    %v1483 = vsel %vm1481, %v1470, -1e+09
    %v1484 = vsel %vm1481, %v1475, -1e+09
    %v1485 = vsel %vm1481, %v1478, -1e+09
    %1486 = vmax.xlane.f32.xlu0 %v1482
    %v1487 = vpop.xlane.xlu0 %1486
    %1488 = vmax.xlane.f32.xlu0 %v1483
    %v1489 = vpop.xlane.xlu0 %1488
    %1490 = vmax.xlane.f32.xlu0 %v1484
    %v1491 = vpop.xlane.xlu0 %1490
    %1492 = vmax.xlane.f32.xlu0 %v1485
    %v1493 = vpop.xlane.xlu0 %1492
    %v1494 = vsub.f32 %v1482, %v1487
    %v1495 = vsub.f32 %v1483, %v1489
    %v1496 = vsub.f32 %v1484, %v1491
    %v1497 = vsub.f32 %v1485, %v1493
    %v1498 = vmul.f32 %v1494, 1.442695
    %v1499 = vpow.pop %v1498
    %v1500 = vmul.f32 %v1495, 1.442695
    %v1501 = vpow.pop %v1500
    %v1502 = vmul.f32 %v1496, 1.442695
    %v1503 = vpow.pop %v1502
    %v1504 = vmul.f32 %v1497, 1.442695
    %v1505 = vpow.pop %v1504
    %1506 = vadd.xlane.f32.xlu0 %v1499
    %v1507 = vpop.xlane.xlu0 %1506
    %1508 = vadd.xlane.f32.xlu0 %v1501
    %v1509 = vpop.xlane.xlu0 %1508
    %1510 = vadd.xlane.f32.xlu0 %v1503
    %v1511 = vpop.xlane.xlu0 %1510
    %1512 = vadd.xlane.f32.xlu0 %v1505
    %v1513 = vpop.xlane.xlu0 %1512
    %v1514 = vlog2.pop %v1507
    %v1515 = vmul.f32 %v1514, 0.6931472
    %v1516 = vlog2.pop %v1509
    %v1517 = vmul.f32 %v1516, 0.6931472
    %v1518 = vlog2.pop %v1511
    %v1519 = vmul.f32 %v1518, 0.6931472
    %v1520 = vlog2.pop %v1513
    %v1521 = vmul.f32 %v1520, 0.6931472
    %v1522 = vadd.f32 %v1515, %v1487
    %v1523 = vadd.f32 %v1517, %v1489
    %v1524 = vadd.f32 %v1519, %v1491
    %v1525 = vadd.f32 %v1521, %v1493
    %1526 = vset.pattern.permute.xlu0 1
    %1527 = vperm.xlu0 %1526, %v25
    %v1528 = vpop.permute.xlu0 %1527
    %1529 = vset.pattern.permute.xlu0 1
    %1530 = vperm.xlu0 %1529, %v26
    %v1531 = vpop.permute.xlu0 %1530
    %1532 = vset.pattern.permute.xlu0 1
    %1533 = vperm.xlu0 %1532, %v27
    %v1534 = vpop.permute.xlu0 %1533
    %1535 = vset.pattern.permute.xlu0 1
    %1536 = vperm.xlu0 %1535, %v28
    %v1537 = vpop.permute.xlu0 %1536
    %vm1538 = vcmp.eq.s32.totalorder %v37, %v1528
    %vm1539 = vcmp.eq.s32.totalorder %v37, %v1531
    %vm1540 = vcmp.eq.s32.totalorder %v37, %v1534
    %vm1541 = vcmp.eq.s32.totalorder %v37, %v1537
    %v1542 = vsel %vm1538, %v1482, 0.0
    %v1543 = vsel %vm1539, %v1483, 0.0
    %v1544 = vsel %vm1540, %v1484, 0.0
    %v1545 = vsel %vm1541, %v1485, 0.0
    %1546 = vadd.xlane.f32.xlu0 %v1542
    %v1547 = vpop.xlane.xlu0 %1546
    %1548 = vadd.xlane.f32.xlu0 %v1543
    %v1549 = vpop.xlane.xlu0 %1548
    %1550 = vadd.xlane.f32.xlu0 %v1544
    %v1551 = vpop.xlane.xlu0 %1550
    %1552 = vadd.xlane.f32.xlu0 %v1545
    %v1553 = vpop.xlane.xlu0 %1552
    %v1554 = vsub.f32 %v1522, %v1547
    %v1555 = vsub.f32 %v1523, %v1549
    %v1556 = vsub.f32 %v1524, %v1551
    %v1557 = vsub.f32 %v1525, %v1553
    %v1558 = vmul.f32 %v1554, %v29
    %v1559 = vmul.f32 %v1555, %v30
    %v1560 = vmul.f32 %v1556, %v31
    %v1561 = vmul.f32 %v1557, %v32
    %1566 = vrot.lane.b32.xlu0 %v1558, 126
    %v1567 = vpop.permute.xlu0 %1566
    %1568 = vrot.lane.b32.xlu0 %v1559, 126
    %v1569 = vpop.permute.xlu0 %1568
    %1570 = vrot.lane.b32.xlu0 %v1560, 126
    %v1571 = vpop.permute.xlu0 %1570
    %1572 = vrot.lane.b32.xlu0 %v1561, 126
    %v1573 = vpop.permute.xlu0 %1572
    %vm1578 = vcmask 7168
    %v1579 = vsel %vm1578, %v1567, 0.0
    %v1580 = vsel %vm1578, %v1569, 0.0
    %v1581 = vadd.f32 %v1579, %v1580
    %v1582 = vsel %vm1578, %v1571, 0.0
    %v1583 = vadd.f32 %v1581, %v1582
    %v1584 = vsel %vm1578, %v1573, 0.0
    %v1585 = vadd.f32 %v1583, %v1584
    %1586 = vadd.xlane.f32.xlu0 %v1585
    %v1587 = vpop.xlane.xlu0 %1586
    %v1588 = vrot.slane %v1587, 4
    %v1589 = vadd.f32 %v1587, %v1588
    %v1590 = vrot.slane %v1589, 2
    %v1591 = vadd.f32 %v1589, %v1590
    %v1592 = vrot.slane %v1591, 1
    %v1593 = vadd.f32 %v1591, %v1592
    %s1594 = vtos %v1593
    %1595 = vrot.lane.b32.xlu0 %v29, 126
    %v1596 = vpop.permute.xlu0 %1595
    %1597 = vrot.lane.b32.xlu0 %v30, 126
    %v1598 = vpop.permute.xlu0 %1597
    %1599 = vrot.lane.b32.xlu0 %v31, 126
    %v1600 = vpop.permute.xlu0 %1599
    %1601 = vrot.lane.b32.xlu0 %v32, 126
    %v1602 = vpop.permute.xlu0 %1601
    %v1607 = vsel %vm1578, %v1596, 0.0
    %v1608 = vsel %vm1578, %v1598, 0.0
    %v1609 = vadd.f32 %v1607, %v1608
    %v1610 = vsel %vm1578, %v1600, 0.0
    %v1611 = vadd.f32 %v1609, %v1610
    %v1612 = vsel %vm1578, %v1602, 0.0
    %v1613 = vadd.f32 %v1611, %v1612
    %1614 = vadd.xlane.f32.xlu0 %v1613
    %v1615 = vpop.xlane.xlu0 %1614
    %v1616 = vrot.slane %v1615, 4
    %v1617 = vadd.f32 %v1615, %v1616
    %v1618 = vrot.slane %v1617, 2
    %v1619 = vadd.f32 %v1617, %v1618
    %v1620 = vrot.slane %v1619, 1
    %v1621 = vadd.f32 %v1619, %v1620
    %s1622 = vtos %v1621
    %s1623 = smax.f32 %s1622, 1.0
    %v1624 = vstv %s1623
    %v1625 = vrcp.pop %v1624
    %s1626 = vtos %v1625
    %s1627 = smul.f32 %s1594, %s1626
    %s1628 = scalar_lea.smem [#allocation2], 0
    %1629 = sst [smem:[%s1628]] %s1627
    // Predicated region
    $region26: #{maskgit_forward.3} parent=1 // pred_check
      _
    $region27: #{maskgit_forward.3} parent=1 // pred_check_branch
      %1631 = sbr.rel (0) target = $region29
    $region28: #{maskgit_forward.3} parent=1 // pred_region
      %s1633 = ssub.s32 16, 16
      %1634 = vsyncadd [#allocation3], %s1633
      %1637 = dma.smem_to_hbm [#allocation2], 16, %s6, [#allocation3]
    $region29: #{maskgit_forward.3} parent=1 // pred_fallthru
      _
    // Predicated region
    $region30: #{maskgit_forward.3} parent=1 // pred_check
      _
    $region31: #{maskgit_forward.3} parent=1 // pred_check_branch
      %1639 = sbr.rel (0) target = $region33
    $region32: #{maskgit_forward.3} parent=1 // pred_region
      %1640 = dma.done [#allocation3], 16
    $region33: #{maskgit_forward.3} parent=1 // pred_fallthru
      _
    %1641 = sfence
    %1642 = vsyncpa [#allocation3], 1

</llo_original>
